<compile_context>
chip_gen: v7x
topology: tpu7x:2x2x1
jax: 0.10.0
libtpu: 0.0.40
codegen_flags: <defaults>
</compile_context>

<pallas_src>
import numpy as np
import jax
import jax.numpy as jnp
from jax import lax
from jax.experimental import pallas as pl
from jax.experimental.pallas import tpu as pltpu

# ---------------- model hyper-params (consistent with the module) ----------------
B = 2            # batch
N = 16           # sequence length
DIM = 128        # channels (dim)
NUM_HEADS = 8
HEAD_DIM = DIM // NUM_HEADS
HID = DIM // 4
SCALE = HEAD_DIM ** (-0.5)
EPS = 1e-6
LAYER_SCALE_INIT = 1e-6

# The block-diagonal-mask attention layout relies on these identities (true for this module).
assert NUM_HEADS * N == DIM and HEAD_DIM == N

# packed-weight column offsets inside the (DIM, 8*DIM) bf16 weight slab
_QKV = (0, 3 * DIM)
_PROJ = (3 * DIM, 4 * DIM)
_W1 = (4 * DIM, 5 * DIM)
_W2 = (5 * DIM, 6 * DIM)
_W3 = (6 * DIM, 7 * DIM)
_BM = (7 * DIM, 8 * DIM)


def _block_kernel(x_ref, w_ref, v_ref, o_ref):
    f32 = jnp.float32
    bf16 = jnp.bfloat16

    x = x_ref[...]            # (N, DIM)  f32 -- one batch
    V = v_ref[...]            # (16, DIM) f32 packed vectors

    # ---- packed vectors ----
    n1w, n1b = V[0:1, :], V[1:2, :]
    bproj, g1 = V[2:3, :], V[3:4, :]
    n2w, n2b = V[4:5, :], V[5:6, :]
    b1, ln1w, ln1b = V[6:7, :], V[7:8, :], V[8:9, :]
    b2, ln2w, ln2b = V[9:10, :], V[10:11, :], V[11:12, :]
    b3, g2 = V[12:13, :], V[13:14, :]
    hmask = V[14:15, :]       # 1.0 on first HID lanes, 0.0 elsewhere

    def ln_full(v, w, b):
        # F.layer_norm over all DIM lanes (biased variance), f32 math
        mu = jnp.mean(v, axis=-1, keepdims=True)
        d = v - mu
        var = jnp.mean(d * d, axis=-1, keepdims=True)
        return d * lax.rsqrt(var + EPS) * w + b

    def ln_hidden(v, w, b):
        # LayerNorm over the first HID lanes only; padded lanes of v are exactly 0,
        # padded lanes of w/b are 0 -> output is exactly 0 there (see pack_params invariant).
        mu = jnp.sum(v, axis=-1, keepdims=True) * (1.0 / HID)
        d = (v - mu) * hmask
        var = jnp.sum(d * d, axis=-1, keepdims=True) * (1.0 / HID)
        return d * lax.rsqrt(var + EPS) * w + b

    # ================= attention branch =================
    xn = ln_full(x, n1w, n1b)                                          # (N, DIM) f32
    qkv = jnp.dot(xn.astype(bf16), w_ref[:, _QKV[0]:_QKV[1]],
                  preferred_element_type=f32)                          # (N, 3*DIM) f32
    q = qkv[:, 0 * DIM:1 * DIM]     # SCALE already folded into the Q weight columns
    k = qkv[:, 1 * DIM:2 * DIM]
    v = qkv[:, 2 * DIM:3 * DIM]

    bm = w_ref[:, _BM[0]:_BM[1]]    # (DIM, DIM) bf16, bm[r, c] = (r//N == c//HEAD_DIM)

    def blockdiag(t):
        # (N, DIM) -> (H*N, DIM) block-diagonal operand:
        #   out[h*N + j, c] = t[j, c] if c // HEAD_DIM == h else 0
        # (sublane-tile + constant 0/1 mask; multiply by 0/1 is exact in bf16)
        return jnp.concatenate([t.astype(bf16)] * NUM_HEADS, axis=0) * bm

    kop = blockdiag(k)                                                 # (128, 128) bf16
    vop = blockdiag(v)                                                 # (128, 128) bf16

    # scores in lane-dense (N, H*N) layout: s[i, h*N + j] = q_i^h . k_j^h (scale pre-folded)
    s = lax.dot_general(q.astype(bf16), kop, (((1,), (1,)), ((), ())),
                        preferred_element_type=f32)                    # (N, 128) f32

    # per-head softmax: the row max is a valid shift for every 16-lane head group
    m = jnp.max(s, axis=-1, keepdims=True)
    e = jnp.exp(s - m)
    denom = jnp.dot(e.astype(bf16), bm, preferred_element_type=f32)    # group sums, broadcast
    p = e / denom                                                      # exact division

    # P @ V -> already in natural (token, head*dim) layout
    o = jnp.dot(p.astype(bf16), vop, preferred_element_type=f32)       # (N, DIM) f32

    # single K=128 output projection (no per-head loop)
    attn = jnp.dot(o.astype(bf16), w_ref[:, _PROJ[0]:_PROJ[1]],
                   preferred_element_type=f32) + bproj
    res1 = x + g1 * attn                                               # residual #1

    # ================= MLP branch =================
    y = ln_full(res1, n2w, n2b)
    h1 = jnp.dot(y.astype(bf16), w_ref[:, _W1[0]:_W1[1]],
                 preferred_element_type=f32) + b1                      # padded lanes stay 0
    h1 = jnp.maximum(ln_hidden(h1, ln1w, ln1b), 0.0)
    h2 = jnp.dot(h1.astype(bf16), w_ref[:, _W2[0]:_W2[1]],
                 preferred_element_type=f32) + b2
    h2 = jnp.maximum(ln_hidden(h2, ln2w, ln2b), 0.0)
    h3 = jnp.dot(h2.astype(bf16), w_ref[:, _W3[0]:_W3[1]],
                 preferred_element_type=f32) + b3

    o_ref[...] = res1 + g2 * h3


def block_forward(x, w_pack, v_pack):
    """x: (B, N, DIM) f32;  w_pack: (DIM, 8*DIM) bf16;  v_pack: (16, DIM) f32."""
    Bn, Nn, Cn = x.shape
    x2 = x.reshape(Bn * Nn, Cn)
    # NOTE: for a multi-layer / repeated-call setting, stack layers (or more token tiles) along
    # an extra grid axis with w_pack indexed per layer so the weight DMA and the ~0.35us per-call
    # overhead are pipelined instead of paid once per pallas_call.
    out2 = pl.pallas_call(
        _block_kernel,
        out_shape=jax.ShapeDtypeStruct((Bn * Nn, Cn), jnp.float32),
        grid_spec=pltpu.PrefetchScalarGridSpec(
            num_scalar_prefetch=0,
            grid=(Bn,),                                    # one batch per step
            in_specs=[
                pl.BlockSpec((Nn, Cn), lambda b: (b, 0)),      # activations: per-batch tile
                pl.BlockSpec(w_pack.shape, lambda b: (0, 0)),  # weight slab: resident
                pl.BlockSpec(v_pack.shape, lambda b: (0, 0)),  # vector slab: resident
            ],
            out_specs=pl.BlockSpec((Nn, Cn), lambda b: (b, 0)),
        ),
        compiler_params=pltpu.CompilerParams(
            dimension_semantics=("parallel",)),            # v7x: shard batches across both TCs
    )(x2, w_pack, v_pack)
    return out2.reshape(Bn, Nn, Cn)


# ---------------- parameter init (natural layout, weights stored as (in, out)) ----------------
def init_params(key, layer_scale=LAYER_SCALE_INIT):
    ks = jax.random.split(key, 8)
    f32 = jnp.float32

    def lin_w(k, fan_in, fan_out):
        return (0.02 * jax.random.normal(k, (fan_in, fan_out))).astype(f32)

    n1w = jnp.ones((1, DIM), f32)
    n1b = jnp.zeros((1, DIM), f32)
    wqkv = lin_w(ks[0], DIM, 3 * DIM)                       # qkv: no bias
    wproj = lin_w(ks[1], DIM, DIM)
    bproj = (0.01 * jax.random.normal(ks[2], (1, DIM))).astype(f32)
    g1 = layer_scale * jnp.ones((1, DIM), f32)
    n2w = jnp.ones((1, DIM), f32)
    n2b = jnp.zeros((1, DIM), f32)
    w1 = lin_w(ks[3], DIM, HID)
    b1 = (0.01 * jax.random.normal(ks[4], (1, HID))).astype(f32)
    ln1w = jnp.ones((1, HID), f32)
    ln1b = jnp.zeros((1, HID), f32)
    w2 = lin_w(ks[5], HID, HID)
    b2 = (0.01 * jax.random.normal(ks[6], (1, HID))).astype(f32)
    ln2w = jnp.ones((1, HID), f32)
    ln2b = jnp.zeros((1, HID), f32)
    w3 = lin_w(ks[7], HID, DIM)
    b3 = jnp.zeros((1, DIM), f32)
    g2 = layer_scale * jnp.ones((1, DIM), f32)

    return (n1w, n1b, wqkv, wproj, bproj, g1, n2w, n2b,
            w1, b1, ln1w, ln1b, w2, b2, ln2w, ln2b, w3, b3, g2)


def pack_params(params):
    """Consolidate the 19 parameters into one bf16 weight slab and one f32 vector slab.

    INVARIANT: all HID->DIM padding below is exactly zero (ln_hidden in the kernel relies on it).
    """
    (n1w, n1b, wqkv, wproj, bproj, g1, n2w, n2b,
     w1, b1, ln1w, ln1b, w2, b2, ln2w, ln2b, w3, b3, g2) = params
    f32 = jnp.float32

    def pad_cols(m, cols):
        return jnp.pad(m, ((0, 0), (0, cols - m.shape[1])))

    def pad_rows(m, rows):
        return jnp.pad(m, ((0, rows - m.shape[0]), (0, 0)))

    # fold the attention scale into the Q columns (qkv has no bias, so this is exact)
    wqkv_scaled = jnp.concatenate([wqkv[:, :DIM] * SCALE, wqkv[:, DIM:]], axis=1)

    w1p = pad_cols(w1, DIM)                       # (DIM, DIM)
    w2p = pad_rows(pad_cols(w2, DIM), DIM)        # (DIM, DIM)
    w3p = pad_rows(w3, DIM)                       # (DIM, DIM)

    # constant block-diagonal 0/1 mask: bm[r, c] = 1 iff r // N == c // HEAD_DIM
    r = np.arange(NUM_HEADS * N)
    c = np.arange(DIM)
    bm = jnp.asarray((r[:, None] // N == c[None, :] // HEAD_DIM).astype(np.float32))

    w_pack = jnp.concatenate([wqkv_scaled, wproj, w1p, w2p, w3p, bm],
                             axis=1).astype(jnp.bfloat16)              # (DIM, 8*DIM)

    def vrow(v):
        return jnp.pad(v, ((0, 0), (0, DIM - v.shape[1])))

    hmask = jnp.concatenate([jnp.ones((1, HID), f32),
                             jnp.zeros((1, DIM - HID), f32)], axis=1)
    v_pack = jnp.concatenate([
        n1w, n1b, bproj, g1, n2w, n2b,
        vrow(b1), vrow(ln1w), vrow(ln1b),
        vrow(b2), vrow(ln2w), vrow(ln2b),
        b3, g2, hmask, jnp.zeros((1, DIM), f32)], axis=0)              # (16, DIM)
    return w_pack, v_pack


# ---------------- pure-JAX f32 reference (matches the PyTorch module) ----------------
def ref_forward(x, params):
    (n1w, n1b, wqkv, wproj, bproj, g1, n2w, n2b,
     w1, b1, ln1w, ln1b, w2, b2, ln2w, ln2b, w3, b3, g2) = params

    def ln(v, w, b):
        mu = v.mean(-1, keepdims=True)
        var = ((v - mu) ** 2).mean(-1, keepdims=True)
        return (v - mu) / jnp.sqrt(var + EPS) * w[0] + b[0]

    inp = x
    xn = ln(x, n1w, n1b)
    qkv = xn @ wqkv                                         # (B, N, 3C)
    qkv = qkv.reshape(x.shape[0], x.shape[1], 3, NUM_HEADS, HEAD_DIM)
    qkv = jnp.transpose(qkv, (2, 0, 3, 1, 4))
    q, k, v = qkv[0], qkv[1], qkv[2]
    attn = jnp.einsum('bhnd,bhmd->bhnm', q, k) * SCALE
    attn = jax.nn.softmax(attn, axis=-1)
    o = jnp.einsum('bhnm,bhmd->bhnd', attn, v)
    o = jnp.transpose(o, (0, 2, 1, 3)).reshape(x.shape)
    o = o @ wproj + bproj[0]
    x1 = inp + g1[0] * o

    y = ln(x1, n2w, n2b)
    h1 = jax.nn.relu(ln(y @ w1 + b1[0], ln1w, ln1b))
    h2 = jax.nn.relu(ln(h1 @ w2 + b2[0], ln2w, ln2b))
    h3 = h2 @ w3 + b3[0]
    return x1 + g2[0] * h3


if __name__ == "__main__":
    key = jax.random.PRNGKey(0)
    kx, kp = jax.random.split(key)
    x = jax.random.normal(kx, (B, N, DIM), dtype=jnp.float32)

    # ---- Test A: module-default layer scale (1e-6), true f32 reference ----
    params = init_params(kp)
    w_pack, v_pack = pack_params(params)
    out = jax.block_until_ready(block_forward(x, w_pack, v_pack))
    ref = jax.block_until_ready(ref_forward(x, params))
    np.testing.assert_allclose(np.asarray(out), np.asarray(ref), rtol=1e-4, atol=1e-5)

    # ---- Test B: O(1) layer scale so the attention/MLP math is actually exercised. ----
    # Weights are pre-rounded to bf16 so kernel and reference see identical weights; the
    # tolerance covers only the kernel's bf16 rounding of MXU activation operands.
    params_b = init_params(kp, layer_scale=1.0)
    params_b = tuple(p.astype(jnp.bfloat16).astype(jnp.float32) for p in params_b)
    w_pack_b, v_pack_b = pack_params(params_b)
    out_b = jax.block_until_ready(block_forward(x, w_pack_b, v_pack_b))
    ref_b = jax.block_until_ready(ref_forward(x, params_b))
    np.testing.assert_allclose(np.asarray(out_b), np.asarray(ref_b), rtol=5e-3, atol=5e-3)

    print("KERNEL_OK")
</pallas_src>

<mosaic_0001>
module attributes {stable_mosaic.version = 11 : i64} {
  func.func @_block_kernel(%arg0: i32, %arg1: memref<16x128xf32, #tpu.memory_space<vmem>>, %arg2: memref<128x1024xbf16, #tpu.memory_space<vmem>>, %arg3: memref<16x128xf32, #tpu.memory_space<vmem>>, %arg4: memref<16x128xf32, #tpu.memory_space<vmem>>) attributes {dimension_semantics = [#tpu.dimension_semantics<parallel>], iteration_bounds = array<i64: 2>, scalar_prefetch = 0 : i64, scratch_operands = 0 : i64, tpu.core_type = #tpu.core_type<tc>, window_params = [{transform_indices = @transform_0, window_bounds = array<i64: 16, 128>}, {pipeline_mode = #tpu.pipeline_mode<synchronous>, transform_indices = @transform_1, window_bounds = array<i64: 128, 1024>}, {pipeline_mode = #tpu.pipeline_mode<synchronous>, transform_indices = @transform_2, window_bounds = array<i64: 16, 128>}, {transform_indices = @transform_3, window_bounds = array<i64: 16, 128>}]} {
    %c0 = arith.constant 0 : index
    %c0_0 = arith.constant 0 : index
    %0 = vector.load %arg1[%c0, %c0_0] : memref<16x128xf32, #tpu.memory_space<vmem>>, vector<16x128xf32>
    %c0_1 = arith.constant 0 : index
    %c0_2 = arith.constant 0 : index
    %1 = vector.load %arg3[%c0_1, %c0_2] : memref<16x128xf32, #tpu.memory_space<vmem>>, vector<16x128xf32>
    %2 = vector.extract_strided_slice %1 {offsets = [0, 0], sizes = [1, 128], strides = [1, 1]} : vector<16x128xf32> to vector<1x128xf32>
    %3 = vector.extract_strided_slice %1 {offsets = [1, 0], sizes = [1, 128], strides = [1, 1]} : vector<16x128xf32> to vector<1x128xf32>
    %4 = vector.extract_strided_slice %1 {offsets = [2, 0], sizes = [1, 128], strides = [1, 1]} : vector<16x128xf32> to vector<1x128xf32>
    %5 = vector.extract_strided_slice %1 {offsets = [3, 0], sizes = [1, 128], strides = [1, 1]} : vector<16x128xf32> to vector<1x128xf32>
    %6 = vector.extract_strided_slice %1 {offsets = [4, 0], sizes = [1, 128], strides = [1, 1]} : vector<16x128xf32> to vector<1x128xf32>
    %7 = vector.extract_strided_slice %1 {offsets = [5, 0], sizes = [1, 128], strides = [1, 1]} : vector<16x128xf32> to vector<1x128xf32>
    %8 = vector.extract_strided_slice %1 {offsets = [6, 0], sizes = [1, 128], strides = [1, 1]} : vector<16x128xf32> to vector<1x128xf32>
    %9 = vector.extract_strided_slice %1 {offsets = [7, 0], sizes = [1, 128], strides = [1, 1]} : vector<16x128xf32> to vector<1x128xf32>
    %10 = vector.extract_strided_slice %1 {offsets = [8, 0], sizes = [1, 128], strides = [1, 1]} : vector<16x128xf32> to vector<1x128xf32>
    %11 = vector.extract_strided_slice %1 {offsets = [9, 0], sizes = [1, 128], strides = [1, 1]} : vector<16x128xf32> to vector<1x128xf32>
    %12 = vector.extract_strided_slice %1 {offsets = [10, 0], sizes = [1, 128], strides = [1, 1]} : vector<16x128xf32> to vector<1x128xf32>
    %13 = vector.extract_strided_slice %1 {offsets = [11, 0], sizes = [1, 128], strides = [1, 1]} : vector<16x128xf32> to vector<1x128xf32>
    %14 = vector.extract_strided_slice %1 {offsets = [12, 0], sizes = [1, 128], strides = [1, 1]} : vector<16x128xf32> to vector<1x128xf32>
    %15 = vector.extract_strided_slice %1 {offsets = [13, 0], sizes = [1, 128], strides = [1, 1]} : vector<16x128xf32> to vector<1x128xf32>
    %16 = vector.extract_strided_slice %1 {offsets = [14, 0], sizes = [1, 128], strides = [1, 1]} : vector<16x128xf32> to vector<1x128xf32>
    %cst = arith.constant dense<0.000000e+00> : vector<16xf32>
    %17 = vector.multi_reduction <add>, %0, %cst [1] : vector<16x128xf32> to vector<16xf32>
    %18 = vector.shape_cast %17 : vector<16xf32> to vector<16x1xf32>
    %cst_3 = arith.constant 1.280000e+02 : f32
    %19 = vector.broadcast %cst_3 : f32 to vector<16x1xf32>
    %20 = arith.divf %18, %19 : vector<16x1xf32>
    %21 = vector.broadcast %20 : vector<16x1xf32> to vector<16x128xf32>
    %22 = arith.subf %0, %21 : vector<16x128xf32>
    %23 = arith.mulf %22, %22 : vector<16x128xf32>
    %cst_4 = arith.constant dense<0.000000e+00> : vector<16xf32>
    %24 = vector.multi_reduction <add>, %23, %cst_4 [1] : vector<16x128xf32> to vector<16xf32>
    %25 = vector.shape_cast %24 : vector<16xf32> to vector<16x1xf32>
    %cst_5 = arith.constant 1.280000e+02 : f32
    %26 = vector.broadcast %cst_5 : f32 to vector<16x1xf32>
    %27 = arith.divf %25, %26 : vector<16x1xf32>
    %cst_6 = arith.constant 9.99999997E-7 : f32
    %28 = vector.broadcast %cst_6 : f32 to vector<16x1xf32>
    %29 = arith.addf %27, %28 : vector<16x1xf32>
    %30 = math.rsqrt %29 : vector<16x1xf32>
    %31 = vector.broadcast %30 : vector<16x1xf32> to vector<16x128xf32>
    %32 = arith.mulf %22, %31 : vector<16x128xf32>
    %33 = vector.broadcast %2 : vector<1x128xf32> to vector<16x128xf32>
    %34 = arith.mulf %32, %33 : vector<16x128xf32>
    %35 = vector.broadcast %3 : vector<1x128xf32> to vector<16x128xf32>
    %36 = arith.addf %34, %35 : vector<16x128xf32>
    %37 = arith.truncf %36 : vector<16x128xf32> to vector<16x128xbf16>
    %c0_7 = arith.constant 0 : index
    %c0_8 = arith.constant 0 : index
    %38 = vector.load %arg2[%c0_7, %c0_8] : memref<128x1024xbf16, #tpu.memory_space<vmem>>, vector<128x384xbf16>
    %cst_9 = arith.constant dense<0.000000e+00> : vector<16x384xf32>
    %39 = tpu.matmul %37, %38, %cst_9 {dimension_numbers = #tpu.dot_dimension_numbers<[1], [0], [0], [1], [0, 0, 1, 1], [], []>} : vector<16x128xbf16>, vector<128x384xbf16>, vector<16x384xf32> -> vector<16x384xf32>
    %40 = vector.extract_strided_slice %39 {offsets = [0, 0], sizes = [16, 128], strides = [1, 1]} : vector<16x384xf32> to vector<16x128xf32>
    %41 = vector.extract_strided_slice %39 {offsets = [0, 128], sizes = [16, 128], strides = [1, 1]} : vector<16x384xf32> to vector<16x128xf32>
    %42 = vector.extract_strided_slice %39 {offsets = [0, 256], sizes = [16, 128], strides = [1, 1]} : vector<16x384xf32> to vector<16x128xf32>
    %c0_10 = arith.constant 0 : index
    %c896 = arith.constant 896 : index
    %43 = vector.load %arg2[%c0_10, %c896] : memref<128x1024xbf16, #tpu.memory_space<vmem>>, vector<128x128xbf16>
    %44 = arith.truncf %41 : vector<16x128xf32> to vector<16x128xbf16>
    %45 = tpu.concatenate %44, %44, %44, %44, %44, %44, %44, %44 in 0 : vector<16x128xbf16>, vector<16x128xbf16>, vector<16x128xbf16>, vector<16x128xbf16>, vector<16x128xbf16>, vector<16x128xbf16>, vector<16x128xbf16>, vector<16x128xbf16> -> vector<128x128xbf16>
    %46 = arith.mulf %45, %43 : vector<128x128xbf16>
    %47 = arith.truncf %42 : vector<16x128xf32> to vector<16x128xbf16>
    %48 = tpu.concatenate %47, %47, %47, %47, %47, %47, %47, %47 in 0 : vector<16x128xbf16>, vector<16x128xbf16>, vector<16x128xbf16>, vector<16x128xbf16>, vector<16x128xbf16>, vector<16x128xbf16>, vector<16x128xbf16>, vector<16x128xbf16> -> vector<128x128xbf16>
    %49 = arith.mulf %48, %43 : vector<128x128xbf16>
    %50 = arith.truncf %40 : vector<16x128xf32> to vector<16x128xbf16>
    %cst_11 = arith.constant dense<0.000000e+00> : vector<16x128xf32>
    %51 = tpu.matmul %50, %46, %cst_11 {dimension_numbers = #tpu.dot_dimension_numbers<[1], [1], [0], [0], [0, 0, 1, 0], [], []>} : vector<16x128xbf16>, vector<128x128xbf16>, vector<16x128xf32> -> vector<16x128xf32>
    %cst_12 = arith.constant dense<0xFF800000> : vector<16xf32>
    %52 = vector.multi_reduction <maximumf>, %51, %cst_12 [1] : vector<16x128xf32> to vector<16xf32>
    %53 = vector.shape_cast %52 : vector<16xf32> to vector<16x1xf32>
    %54 = vector.broadcast %53 : vector<16x1xf32> to vector<16x128xf32>
    %55 = arith.subf %51, %54 : vector<16x128xf32>
    %56 = math.exp %55 : vector<16x128xf32>
    %57 = arith.truncf %56 : vector<16x128xf32> to vector<16x128xbf16>
    %cst_13 = arith.constant dense<0.000000e+00> : vector<16x128xf32>
    %58 = tpu.matmul %57, %43, %cst_13 {dimension_numbers = #tpu.dot_dimension_numbers<[1], [0], [0], [1], [0, 0, 1, 1], [], []>} : vector<16x128xbf16>, vector<128x128xbf16>, vector<16x128xf32> -> vector<16x128xf32>
    %59 = arith.divf %56, %58 : vector<16x128xf32>
    %60 = arith.truncf %59 : vector<16x128xf32> to vector<16x128xbf16>
    %cst_14 = arith.constant dense<0.000000e+00> : vector<16x128xf32>
    %61 = tpu.matmul %60, %49, %cst_14 {dimension_numbers = #tpu.dot_dimension_numbers<[1], [0], [0], [1], [0, 0, 1, 1], [], []>} : vector<16x128xbf16>, vector<128x128xbf16>, vector<16x128xf32> -> vector<16x128xf32>
    %62 = arith.truncf %61 : vector<16x128xf32> to vector<16x128xbf16>
    %c0_15 = arith.constant 0 : index
    %c384 = arith.constant 384 : index
    %63 = vector.load %arg2[%c0_15, %c384] : memref<128x1024xbf16, #tpu.memory_space<vmem>>, vector<128x128xbf16>
    %cst_16 = arith.constant dense<0.000000e+00> : vector<16x128xf32>
    %64 = tpu.matmul %62, %63, %cst_16 {dimension_numbers = #tpu.dot_dimension_numbers<[1], [0], [0], [1], [0, 0, 1, 1], [], []>} : vector<16x128xbf16>, vector<128x128xbf16>, vector<16x128xf32> -> vector<16x128xf32>
    %65 = vector.broadcast %4 : vector<1x128xf32> to vector<16x128xf32>
    %66 = arith.addf %64, %65 : vector<16x128xf32>
    %67 = vector.broadcast %5 : vector<1x128xf32> to vector<16x128xf32>
    %68 = arith.mulf %67, %66 : vector<16x128xf32>
    %69 = arith.addf %0, %68 : vector<16x128xf32>
    %cst_17 = arith.constant dense<0.000000e+00> : vector<16xf32>
    %70 = vector.multi_reduction <add>, %69, %cst_17 [1] : vector<16x128xf32> to vector<16xf32>
    %71 = vector.shape_cast %70 : vector<16xf32> to vector<16x1xf32>
    %cst_18 = arith.constant 1.280000e+02 : f32
    %72 = vector.broadcast %cst_18 : f32 to vector<16x1xf32>
    %73 = arith.divf %71, %72 : vector<16x1xf32>
    %74 = vector.broadcast %73 : vector<16x1xf32> to vector<16x128xf32>
    %75 = arith.subf %69, %74 : vector<16x128xf32>
    %76 = arith.mulf %75, %75 : vector<16x128xf32>
    %cst_19 = arith.constant dense<0.000000e+00> : vector<16xf32>
    %77 = vector.multi_reduction <add>, %76, %cst_19 [1] : vector<16x128xf32> to vector<16xf32>
    %78 = vector.shape_cast %77 : vector<16xf32> to vector<16x1xf32>
    %cst_20 = arith.constant 1.280000e+02 : f32
    %79 = vector.broadcast %cst_20 : f32 to vector<16x1xf32>
    %80 = arith.divf %78, %79 : vector<16x1xf32>
    %cst_21 = arith.constant 9.99999997E-7 : f32
    %81 = vector.broadcast %cst_21 : f32 to vector<16x1xf32>
    %82 = arith.addf %80, %81 : vector<16x1xf32>
    %83 = math.rsqrt %82 : vector<16x1xf32>
    %84 = vector.broadcast %83 : vector<16x1xf32> to vector<16x128xf32>
    %85 = arith.mulf %75, %84 : vector<16x128xf32>
    %86 = vector.broadcast %6 : vector<1x128xf32> to vector<16x128xf32>
    %87 = arith.mulf %85, %86 : vector<16x128xf32>
    %88 = vector.broadcast %7 : vector<1x128xf32> to vector<16x128xf32>
    %89 = arith.addf %87, %88 : vector<16x128xf32>
    %90 = arith.truncf %89 : vector<16x128xf32> to vector<16x128xbf16>
    %c0_22 = arith.constant 0 : index
    %c512 = arith.constant 512 : index
    %91 = vector.load %arg2[%c0_22, %c512] : memref<128x1024xbf16, #tpu.memory_space<vmem>>, vector<128x128xbf16>
    %cst_23 = arith.constant dense<0.000000e+00> : vector<16x128xf32>
    %92 = tpu.matmul %90, %91, %cst_23 {dimension_numbers = #tpu.dot_dimension_numbers<[1], [0], [0], [1], [0, 0, 1, 1], [], []>} : vector<16x128xbf16>, vector<128x128xbf16>, vector<16x128xf32> -> vector<16x128xf32>
    %93 = vector.broadcast %8 : vector<1x128xf32> to vector<16x128xf32>
    %94 = arith.addf %92, %93 : vector<16x128xf32>
    %cst_24 = arith.constant dense<0.000000e+00> : vector<16xf32>
    %95 = vector.multi_reduction <add>, %94, %cst_24 [1] : vector<16x128xf32> to vector<16xf32>
    %96 = vector.shape_cast %95 : vector<16xf32> to vector<16x1xf32>
    %cst_25 = arith.constant 3.125000e-02 : f32
    %97 = vector.broadcast %cst_25 : f32 to vector<16x1xf32>
    %98 = arith.mulf %96, %97 : vector<16x1xf32>
    %99 = vector.broadcast %98 : vector<16x1xf32> to vector<16x128xf32>
    %100 = arith.subf %94, %99 : vector<16x128xf32>
    %101 = vector.broadcast %16 : vector<1x128xf32> to vector<16x128xf32>
    %102 = arith.mulf %100, %101 : vector<16x128xf32>
    %103 = arith.mulf %102, %102 : vector<16x128xf32>
    %cst_26 = arith.constant dense<0.000000e+00> : vector<16xf32>
    %104 = vector.multi_reduction <add>, %103, %cst_26 [1] : vector<16x128xf32> to vector<16xf32>
    %105 = vector.shape_cast %104 : vector<16xf32> to vector<16x1xf32>
    %cst_27 = arith.constant 3.125000e-02 : f32
    %106 = vector.broadcast %cst_27 : f32 to vector<16x1xf32>
    %107 = arith.mulf %105, %106 : vector<16x1xf32>
    %cst_28 = arith.constant 9.99999997E-7 : f32
    %108 = vector.broadcast %cst_28 : f32 to vector<16x1xf32>
    %109 = arith.addf %107, %108 : vector<16x1xf32>
    %110 = math.rsqrt %109 : vector<16x1xf32>
    %111 = vector.broadcast %110 : vector<16x1xf32> to vector<16x128xf32>
    %112 = arith.mulf %102, %111 : vector<16x128xf32>
    %113 = vector.broadcast %9 : vector<1x128xf32> to vector<16x128xf32>
    %114 = arith.mulf %112, %113 : vector<16x128xf32>
    %115 = vector.broadcast %10 : vector<1x128xf32> to vector<16x128xf32>
    %116 = arith.addf %114, %115 : vector<16x128xf32>
    %cst_29 = arith.constant 0.000000e+00 : f32
    %117 = vector.broadcast %cst_29 : f32 to vector<16x128xf32>
    %118 = arith.maximumf %116, %117 : vector<16x128xf32>
    %119 = arith.truncf %118 : vector<16x128xf32> to vector<16x128xbf16>
    %c0_30 = arith.constant 0 : index
    %c640 = arith.constant 640 : index
    %120 = vector.load %arg2[%c0_30, %c640] : memref<128x1024xbf16, #tpu.memory_space<vmem>>, vector<128x128xbf16>
    %cst_31 = arith.constant dense<0.000000e+00> : vector<16x128xf32>
    %121 = tpu.matmul %119, %120, %cst_31 {dimension_numbers = #tpu.dot_dimension_numbers<[1], [0], [0], [1], [0, 0, 1, 1], [], []>} : vector<16x128xbf16>, vector<128x128xbf16>, vector<16x128xf32> -> vector<16x128xf32>
    %122 = vector.broadcast %11 : vector<1x128xf32> to vector<16x128xf32>
    %123 = arith.addf %121, %122 : vector<16x128xf32>
    %cst_32 = arith.constant dense<0.000000e+00> : vector<16xf32>
    %124 = vector.multi_reduction <add>, %123, %cst_32 [1] : vector<16x128xf32> to vector<16xf32>
    %125 = vector.shape_cast %124 : vector<16xf32> to vector<16x1xf32>
    %cst_33 = arith.constant 3.125000e-02 : f32
    %126 = vector.broadcast %cst_33 : f32 to vector<16x1xf32>
    %127 = arith.mulf %125, %126 : vector<16x1xf32>
    %128 = vector.broadcast %127 : vector<16x1xf32> to vector<16x128xf32>
    %129 = arith.subf %123, %128 : vector<16x128xf32>
    %130 = vector.broadcast %16 : vector<1x128xf32> to vector<16x128xf32>
    %131 = arith.mulf %129, %130 : vector<16x128xf32>
    %132 = arith.mulf %131, %131 : vector<16x128xf32>
    %cst_34 = arith.constant dense<0.000000e+00> : vector<16xf32>
    %133 = vector.multi_reduction <add>, %132, %cst_34 [1] : vector<16x128xf32> to vector<16xf32>
    %134 = vector.shape_cast %133 : vector<16xf32> to vector<16x1xf32>
    %cst_35 = arith.constant 3.125000e-02 : f32
    %135 = vector.broadcast %cst_35 : f32 to vector<16x1xf32>
    %136 = arith.mulf %134, %135 : vector<16x1xf32>
    %cst_36 = arith.constant 9.99999997E-7 : f32
    %137 = vector.broadcast %cst_36 : f32 to vector<16x1xf32>
    %138 = arith.addf %136, %137 : vector<16x1xf32>
    %139 = math.rsqrt %138 : vector<16x1xf32>
    %140 = vector.broadcast %139 : vector<16x1xf32> to vector<16x128xf32>
    %141 = arith.mulf %131, %140 : vector<16x128xf32>
    %142 = vector.broadcast %12 : vector<1x128xf32> to vector<16x128xf32>
    %143 = arith.mulf %141, %142 : vector<16x128xf32>
    %144 = vector.broadcast %13 : vector<1x128xf32> to vector<16x128xf32>
    %145 = arith.addf %143, %144 : vector<16x128xf32>
    %cst_37 = arith.constant 0.000000e+00 : f32
    %146 = vector.broadcast %cst_37 : f32 to vector<16x128xf32>
    %147 = arith.maximumf %145, %146 : vector<16x128xf32>
    %148 = arith.truncf %147 : vector<16x128xf32> to vector<16x128xbf16>
    %c0_38 = arith.constant 0 : index
    %c768 = arith.constant 768 : index
    %149 = vector.load %arg2[%c0_38, %c768] : memref<128x1024xbf16, #tpu.memory_space<vmem>>, vector<128x128xbf16>
    %cst_39 = arith.constant dense<0.000000e+00> : vector<16x128xf32>
    %150 = tpu.matmul %148, %149, %cst_39 {dimension_numbers = #tpu.dot_dimension_numbers<[1], [0], [0], [1], [0, 0, 1, 1], [], []>} : vector<16x128xbf16>, vector<128x128xbf16>, vector<16x128xf32> -> vector<16x128xf32>
    %151 = vector.broadcast %14 : vector<1x128xf32> to vector<16x128xf32>
    %152 = arith.addf %150, %151 : vector<16x128xf32>
    %153 = vector.broadcast %15 : vector<1x128xf32> to vector<16x128xf32>
    %154 = arith.mulf %153, %152 : vector<16x128xf32>
    %155 = arith.addf %69, %154 : vector<16x128xf32>
    %c0_40 = arith.constant 0 : index
    %c0_41 = arith.constant 0 : index
    %156 = vector.load %arg4[%c0_40, %c0_41] : memref<16x128xf32, #tpu.memory_space<vmem>>, vector<16x128xf32>
    tpu.vector_store %arg4[%c0_40, %c0_41], %155 {strides = array<i32>} : memref<16x128xf32, #tpu.memory_space<vmem>>, vector<16x128xf32>,
    return
  }
  func.func @transform_0(%arg0: i32) -> (i32, i32) {
    %c0_i32 = arith.constant 0 : i32
    %c0_i32_0 = arith.constant 0 : i32
    return %arg0, %c0_i32 : i32, i32
  }
  func.func @transform_1(%arg0: i32) -> (i32, i32) {
    %c0_i32 = arith.constant 0 : i32
    %c0_i32_0 = arith.constant 0 : i32
    %c0_i32_1 = arith.constant 0 : i32
    return %c0_i32, %c0_i32_0 : i32, i32
  }
  func.func @transform_2(%arg0: i32) -> (i32, i32) {
    %c0_i32 = arith.constant 0 : i32
    %c0_i32_0 = arith.constant 0 : i32
    %c0_i32_1 = arith.constant 0 : i32
    return %c0_i32, %c0_i32_0 : i32, i32
  }
  func.func @transform_3(%arg0: i32) -> (i32, i32) {
    %c0_i32 = arith.constant 0 : i32
    %c0_i32_0 = arith.constant 0 : i32
    return %arg0, %c0_i32 : i32, i32
  }
}

</mosaic_0001>

<llo_original>
// kernel: tpu_custom_call.1
$region0: #{tpu_custom_call.1}
  #allocation0 [shape = 'u32[]', space=smem, size = 0x4, offset = 0x4, fixed_abs, tag = 'smem constant byte address 0x4 - core index']
  #allocation1 [shape = 'u32[144,128]{1,0:T(1,128)}', space=vmem, size = 0x12000, scoped, tag = 'internal scratch']
  %s0 = inlined_call_operand.hbm [shape: f32[32,128], index: 0, kind: input, shape index: {}]
  %s1 = inlined_call_operand.hbm [shape: bf16[128,1024], index: 1, kind: input, shape index: {}]
  %s2 = inlined_call_operand.hbm [shape: f32[16,128], index: 2, kind: input, shape index: {}]
  %s3 = inlined_call_operand.hbm [shape: f32[32,128], index: 3, kind: output, shape index: {}]
  %s4 = sld [smem:[#allocation0]]
  $region57: #{tpu_custom_call.1} parent=0
    _
  %s6 = ssub.s32 1, %s4
  %s7 = scalar_select 0, %s6, %s4
  $region1: #{tpu_custom_call.1} parent=0
    #allocation2 [shape = 'u8[16384]{0}', space=vmem, size = 0x4000, scoped, tag = 'input window, operand 0']
    #allocation3 [shape = 's32[2]{0}', space=sflag, size = 0x8, scoped, tag = 'scoped memory for tpu_custom_call.1']
    #allocation4 [shape = 's32[2]{0}', space=sflag, size = 0x8, scoped, tag = 'scoped memory for tpu_custom_call.1']
    #allocation5 [shape = 'u8[262144]{0}', space=vmem, size = 0x40000, scoped, tag = 'input window, operand 1, single buffered']
    #allocation6 [shape = 's32[1]{0}', space=sflag, size = 0x4, scoped, tag = 'scoped memory for tpu_custom_call.1']
    #allocation7 [shape = 'u8[8192]{0}', space=vmem, size = 0x2000, scoped, tag = 'input window, operand 2, single buffered']
    #allocation8 [shape = 'u8[16384]{0}', space=vmem, size = 0x4000, scoped, tag = 'output window, operand 0']
    %8 = vsyncpa [#allocation3], 0
    %s9 = scalar_lea.sflag [#allocation3], 1
    %10 = vsyncpa %s9, 0
    %11 = vsyncpa [#allocation6], 0
    %12 = vsyncpa [#allocation4], 0
    %s13 = scalar_lea.sflag [#allocation4], 1
    %14 = vsyncpa %s13, 0
    loop: start=0, step=1, limit=4
    $region2: #{tpu_custom_call.1} parent=1 // loop_pre_header
      _
    $region3: #{tpu_custom_call.1} parent=1 // loop_header
      %s16 = sphi 0, %s20
      %p17 = scmp.ge.s32.totalorder %s16, 4
      %s26 = sphi 0, %s28
      %s29 = sphi 0, %s26
      %s30 = sphi 0, %s29
      %s46 = sphi 0, %s30
      %s50 = sphi 0, %s50
      %s52 = sphi 0, %s50
      %s53 = sphi 0, %s52
      %s67 = sphi 0, %s53
      %s71 = sphi 0, %s71
      %s73 = sphi 0, %s71
      %s74 = sphi 0, %s73
      %s88 = sphi 0, %s74
      %s94 = sphi 0, %s96
      %s97 = sphi 0, %s94
      %s98 = sphi 0, %s97
      %s114 = sphi 0, %s98
    $region4: #{tpu_custom_call.1} parent=1 // loop_header_branch
      %19 = sbr.rel (%p17) target = $region8
    $region5: #{tpu_custom_call.1} parent=1 // loop_body
      %s21 = ssub.s32 %s16, 1
      %s22 = ssub.s32 %s16, 2
      %s23 = sadd.s32 %s16, 1
      %s24 = ssub.s32 %s16, %s23
      %p25 = scmp.eq.s32.totalorder %s24, 0
      %s27 = sadd.s32 %s26, 1
      %s28 = scalar_select %p25, %s26, %s27
      %p31 = pneg %p25
      %p32 = scmp.eq.s32.totalorder %s16, 1
      %p33 = por %p31, %p32
      %p34 = scmp.ne.s32.totalorder %s26, %s29
      %p35 = scmp.eq.s32.totalorder %s16, 0
      %p36 = por %p34, %p35
      %p37 = scmp.ne.s32.totalorder %s26, %s29
      %p38 = scmp.eq.s32.totalorder %s21, 1
      %p39 = por %p37, %p38
      %p40 = scmp.ne.s32.totalorder %s29, %s30
      %p41 = scmp.eq.s32.totalorder %s21, 0
      %p42 = por %p40, %p41
      %p43 = scmp.ne.s32.totalorder %s29, %s30
      %p44 = scmp.eq.s32.totalorder %s22, 1
      %p45 = por %p43, %p44
      %p47 = scmp.ne.s32.totalorder %s30, %s46
      %p48 = scmp.eq.s32.totalorder %s22, 0
      %p49 = por %p47, %p48
      %s51 = sadd.s32 %s50, 1
      %p54 = scmp.eq.s32.totalorder %s16, 1
      %p55 = scmp.ne.s32.totalorder %s50, %s52
      %p56 = scmp.eq.s32.totalorder %s16, 0
      %p57 = por %p55, %p56
      %p58 = scmp.ne.s32.totalorder %s50, %s52
      %p59 = scmp.eq.s32.totalorder %s21, 1
      %p60 = por %p58, %p59
      %p61 = scmp.ne.s32.totalorder %s52, %s53
      %p62 = scmp.eq.s32.totalorder %s21, 0
      %p63 = por %p61, %p62
      %p64 = scmp.ne.s32.totalorder %s52, %s53
      %p65 = scmp.eq.s32.totalorder %s22, 1
      %p66 = por %p64, %p65
      %p68 = scmp.ne.s32.totalorder %s53, %s67
      %p69 = scmp.eq.s32.totalorder %s22, 0
      %p70 = por %p68, %p69
      %s72 = sadd.s32 %s71, 1
      %p75 = scmp.eq.s32.totalorder %s16, 1
      %p76 = scmp.ne.s32.totalorder %s71, %s73
      %p77 = scmp.eq.s32.totalorder %s16, 0
      %p78 = por %p76, %p77
      %p79 = scmp.ne.s32.totalorder %s71, %s73
      %p80 = scmp.eq.s32.totalorder %s21, 1
      %p81 = por %p79, %p80
      %p82 = scmp.ne.s32.totalorder %s73, %s74
      %p83 = scmp.eq.s32.totalorder %s21, 0
      %p84 = por %p82, %p83
      %p85 = scmp.ne.s32.totalorder %s73, %s74
      %p86 = scmp.eq.s32.totalorder %s22, 1
      %p87 = por %p85, %p86
      %p89 = scmp.ne.s32.totalorder %s74, %s88
      %p90 = scmp.eq.s32.totalorder %s22, 0
      %p91 = por %p89, %p90
      %s92 = ssub.s32 %s16, %s23
      %p93 = scmp.eq.s32.totalorder %s92, 0
      %s95 = sadd.s32 %s94, 1
      %s96 = scalar_select %p93, %s94, %s95
      %p99 = pneg %p93
      %p100 = scmp.eq.s32.totalorder %s16, 1
      %p101 = por %p99, %p100
      %p102 = scmp.ne.s32.totalorder %s94, %s97
      %p103 = scmp.eq.s32.totalorder %s16, 0
      %p104 = por %p102, %p103
      %p105 = scmp.ne.s32.totalorder %s94, %s97
      %p106 = scmp.eq.s32.totalorder %s21, 1
      %p107 = por %p105, %p106
      %p108 = scmp.ne.s32.totalorder %s97, %s98
      %p109 = scmp.eq.s32.totalorder %s21, 0
      %p110 = por %p108, %p109
      %p111 = scmp.ne.s32.totalorder %s97, %s98
      %p112 = scmp.eq.s32.totalorder %s22, 1
      %p113 = por %p111, %p112
      %p115 = scmp.ne.s32.totalorder %s98, %s114
      %p116 = scmp.eq.s32.totalorder %s22, 0
      %p117 = por %p115, %p116
      %p118 = scmp.le.s32.totalorder 1, %s16
      %p119 = scmp.lt.s32.totalorder %s16, 3
      %p120 = pnand %p118, %p119
      %p121 = pneg %p120
      // Predicated region
      $region9: #{tpu_custom_call.1} parent=5 // pred_check
        _
      $region10: #{tpu_custom_call.1} parent=5 // pred_check_branch
        %123 = sbr.rel (%p120) target = $region12
      $region11: #{tpu_custom_call.1} parent=5 // pred_region
        %s124 = ssub.s32 %s16, 1
        // Predicated region
        $region13: #{tpu_custom_call.1} parent=11 // pred_check
          %p125 = pneg %p63
        $region14: #{tpu_custom_call.1} parent=11 // pred_check_branch
          %127 = sbr.rel (%p125) target = $region16
        $region15: #{tpu_custom_call.1} parent=11 // pred_region
          %s129 = ssub.s32 8192, 8192
          %130 = vsyncadd [#allocation6], %s129
          %s131 = sshll.u32 [#allocation5], 4
          %s132 = int_to_ptr.vmem [resolvable:$true] %s131
          %137 = dma.hbm_to_vmem [thread:$0]  %s1, 8192, %s132, [#allocation6], 512, 512, 32
        $region16: #{tpu_custom_call.1} parent=11 // pred_fallthru
          _
        // Predicated region
        $region17: #{tpu_custom_call.1} parent=11 // pred_check
          %p138 = pneg %p84
        $region18: #{tpu_custom_call.1} parent=11 // pred_check_branch
          %140 = sbr.rel (%p138) target = $region20
        $region19: #{tpu_custom_call.1} parent=11 // pred_region
          %s142 = ssub.s32 256, 256
          %143 = vsyncadd [#allocation6], %s142
          %s144 = sshll.u32 [#allocation7], 4
          %s145 = int_to_ptr.vmem [resolvable:$true] %s144
          %150 = dma.hbm_to_vmem [thread:$0]  %s2, 256, %s145, [#allocation6], 128, 128, 8
        $region20: #{tpu_custom_call.1} parent=11 // pred_fallthru
          _
      $region12: #{tpu_custom_call.1} parent=5 // pred_fallthru
        _
      %p151 = scmp.lt.s32.totalorder %s16, 2
      // Predicated region
      $region21: #{tpu_custom_call.1} parent=5 // pred_check
        %p152 = pneg %p151
      $region22: #{tpu_custom_call.1} parent=5 // pred_check_branch
        %154 = sbr.rel (%p152) target = $region24
      $region23: #{tpu_custom_call.1} parent=5 // pred_region
        // Predicated region
        $region25: #{tpu_custom_call.1} parent=23 // pred_check
          %p155 = pneg %p36
        $region26: #{tpu_custom_call.1} parent=23 // pred_check_branch
          %157 = sbr.rel (%p155) target = $region28
        $region27: #{tpu_custom_call.1} parent=23 // pred_region
          %s158 = sand.u32 %s26, 1
          %s159 = scalar_lea.sflag [#allocation3], %s158
          %s160 = sand.u32 %s26, 1
          %s161 = smul.addr %s160, 16
          %s162 = scalar_lea.vmem [#allocation2], %s161
          %s163 = smul.u32 2, %s16
          %s165 = ssub.s32 256, 256
          %166 = vsyncadd %s159, %s165
          %s167 = smul.addr %s163, 128
          %s168 = scalar_lea.hbm %s0, %s167
          %s169 = sshll.u32 %s162, 4
          %s170 = int_to_ptr.vmem [resolvable:$true] %s169
          %175 = dma.hbm_to_vmem [thread:$0]  %s168, 256, %s170, %s159, 128, 128, 8
        $region28: #{tpu_custom_call.1} parent=23 // pred_fallthru
          _
      $region24: #{tpu_custom_call.1} parent=5 // pred_fallthru
        _
      %p176 = scmp.le.s32.totalorder 1, %s16
      %p177 = scmp.lt.s32.totalorder %s16, 3
      %p178 = pnand %p176, %p177
      %p179 = pneg %p178
      // Predicated region
      $region29: #{tpu_custom_call.1} parent=5 // pred_check
        _
      $region30: #{tpu_custom_call.1} parent=5 // pred_check_branch
        %181 = sbr.rel (%p178) target = $region32
      $region31: #{tpu_custom_call.1} parent=5 // pred_region
        %s182 = ssub.s32 %s16, 1
        %s183 = sand.u32 %s29, 1
        %s184 = scalar_lea.sflag [#allocation3], %s183
        %s185 = sand.u32 %s29, 1
        %s186 = smul.addr %s185, 16
        %s187 = scalar_lea.vmem [#allocation2], %s186
        // Predicated region
        $region33: #{tpu_custom_call.1} parent=31 // pred_check
          %p188 = pneg %p42
        $region34: #{tpu_custom_call.1} parent=31 // pred_check_branch
          %190 = sbr.rel (%p188) target = $region36
        $region35: #{tpu_custom_call.1} parent=31 // pred_region
          %191 = dma.done %s184, 256
        $region36: #{tpu_custom_call.1} parent=31 // pred_fallthru
          _
        // Predicated region
        $region37: #{tpu_custom_call.1} parent=31 // pred_check
          %p192 = pneg %p63
        $region38: #{tpu_custom_call.1} parent=31 // pred_check_branch
          %194 = sbr.rel (%p192) target = $region40
        $region39: #{tpu_custom_call.1} parent=31 // pred_region
          %195 = dma.done [#allocation6], 8192
        $region40: #{tpu_custom_call.1} parent=31 // pred_fallthru
          _
        // Predicated region
        $region41: #{tpu_custom_call.1} parent=31 // pred_check
          %p196 = pneg %p84
        $region42: #{tpu_custom_call.1} parent=31 // pred_check_branch
          %198 = sbr.rel (%p196) target = $region44
        $region43: #{tpu_custom_call.1} parent=31 // pred_region
          %199 = dma.done [#allocation6], 256
        $region44: #{tpu_custom_call.1} parent=31 // pred_fallthru
          _
        %s200 = sand.u32 %s29, 1
        %s201 = scalar_lea.sflag [#allocation3], %s200
        %s202 = sand.u32 %s29, 1
        %s203 = smul.addr %s202, 16
        %s204 = scalar_lea.vmem [#allocation2], %s203
        %p205 = pneg %p42
        %p206 = pneg %p39
        %p207 = pneg %p63
        %p208 = pneg %p60
        %p209 = pneg %p84
        %p210 = pneg %p81
        %p211 = pneg %p110
        %p212 = pneg %p107
        %s213 = sand.u32 %s97, 1
        %s214 = scalar_lea.sflag [#allocation4], %s213
        %s215 = sand.u32 %s97, 1
        %s216 = smul.addr %s215, 16
        %s217 = scalar_lea.vmem [#allocation8], %s216
        %s218 = smul.u32 2, %s21
        %s219 = smul.u32 2, %s21
        %v221 = vld [vmem:[%s187] sm:$0xff]
        %v222 = vld [vmem:[%s187 + $0x8] sm:$0xff]
        %v223 = vld [vmem:[#allocation7] sm:$0xff]
        %v224 = vld [vmem:[#allocation7 + $0x8] sm:$0xff]
        %225 = vadd.xlane.f32.xlu0 %v221
        %v226 = vpop.xlane.xlu0 %225
        %227 = vadd.xlane.f32.xlu0 %v222
        %v228 = vpop.xlane.xlu0 %227
        %v229 = vrcp.pop 128.0
        %v230 = vmul.f32 %v226, %v229
        %v231 = vmul.f32 %v228, %v229
        %v232 = vsub.f32 %v221, %v230
        %v233 = vsub.f32 %v222, %v231
        %v234 = vmul.f32 %v232, %v232
        %v235 = vmul.f32 %v233, %v233
        %236 = vadd.xlane.f32.xlu0 %v234
        %v237 = vpop.xlane.xlu0 %236
        %238 = vadd.xlane.f32.xlu0 %v235
        %v239 = vpop.xlane.xlu0 %238
        %v240 = vmul.f32 %v237, %v229
        %v241 = vmul.f32 %v239, %v229
        %v242 = vadd.f32 %v240, 1e-06
        %v243 = vadd.f32 %v241, 1e-06
        %v244 = vrsqrt.pop %v242
        %v245 = vrsqrt.pop %v243
        %v246 = vmul.f32 %v232, %v244
        %v247 = vmul.f32 %v233, %v245
        %v248 = vlaneseq
        %v249 = vshrl.u32 %v248, 7
        %v250 = vsub.s32 0, %v249
        %v251 = vrot.slane %v223, %v250
        %v252 = vmul.f32 %v246, %v251
        %v253 = vmul.f32 %v247, %v251
        %v254 = vlaneseq
        %v255 = vshrl.u32 %v254, 7
        %v256 = vsub.s32 1, %v255
        %v257 = vrot.slane %v223, %v256
        %v258 = vadd.f32 %v252, %v257
        %v259 = vadd.f32 %v253, %v257
        %v260 = vpack.c.bf16 %v259, %v258
        %v261 = vld [vmem:[#allocation5] sm:$0xff]
        %v262 = vld [vmem:[#allocation5 + $0x8] sm:$0xf]
        %v263 = vld [vmem:[#allocation5 + $0x20] sm:$0xff]
        %v264 = vld [vmem:[#allocation5 + $0x28] sm:$0xf]
        %v265 = vld [vmem:[#allocation5 + $0x40] sm:$0xff]
        %v266 = vld [vmem:[#allocation5 + $0x48] sm:$0xf]
        %v267 = vld [vmem:[#allocation5 + $0x60] sm:$0xff]
        %v268 = vld [vmem:[#allocation5 + $0x68] sm:$0xf]
        %v269 = vld [vmem:[#allocation5 + $0x80] sm:$0xff]
        %v270 = vld [vmem:[#allocation5 + $0x88] sm:$0xf]
        %v271 = vld [vmem:[#allocation5 + $0xa0] sm:$0xff]
        %v272 = vld [vmem:[#allocation5 + $0xa8] sm:$0xf]
        %v273 = vld [vmem:[#allocation5 + $0xc0] sm:$0xff]
        %v274 = vld [vmem:[#allocation5 + $0xc8] sm:$0xf]
        %v275 = vld [vmem:[#allocation5 + $0xe0] sm:$0xff]
        %v276 = vld [vmem:[#allocation5 + $0xe8] sm:$0xf]
        %v277 = vld [vmem:[#allocation5 + $0x100] sm:$0xff]
        %v278 = vld [vmem:[#allocation5 + $0x108] sm:$0xf]
        %v279 = vld [vmem:[#allocation5 + $0x120] sm:$0xff]
        %v280 = vld [vmem:[#allocation5 + $0x128] sm:$0xf]
        %v281 = vld [vmem:[#allocation5 + $0x140] sm:$0xff]
        %v282 = vld [vmem:[#allocation5 + $0x148] sm:$0xf]
        %v283 = vld [vmem:[#allocation5 + $0x160] sm:$0xff]
        %v284 = vld [vmem:[#allocation5 + $0x168] sm:$0xf]
        %v285 = vld [vmem:[#allocation5 + $0x180] sm:$0xff]
        %v286 = vld [vmem:[#allocation5 + $0x188] sm:$0xf]
        %v287 = vld [vmem:[#allocation5 + $0x1a0] sm:$0xff]
        %v288 = vld [vmem:[#allocation5 + $0x1a8] sm:$0xf]
        %v289 = vld [vmem:[#allocation5 + $0x1c0] sm:$0xff]
        %v290 = vld [vmem:[#allocation5 + $0x1c8] sm:$0xf]
        %v291 = vld [vmem:[#allocation5 + $0x1e0] sm:$0xff]
        %v292 = vld [vmem:[#allocation5 + $0x1e8] sm:$0xf]
        %v325 = vunpack.c.l.b16 %v261
        %v326 = vunpack.c.h.b16 %v261
        %v327 = vunpack.c.l.b16 %v262
        %v328 = vunpack.c.l.b16 %v263
        %v329 = vunpack.c.h.b16 %v263
        %v330 = vunpack.c.l.b16 %v264
        %v331 = vunpack.c.l.b16 %v265
        %v332 = vunpack.c.h.b16 %v265
        %v333 = vunpack.c.l.b16 %v266
        %v334 = vunpack.c.l.b16 %v267
        %v335 = vunpack.c.h.b16 %v267
        %v336 = vunpack.c.l.b16 %v268
        %v337 = vunpack.c.l.b16 %v269
        %v338 = vunpack.c.h.b16 %v269
        %v339 = vunpack.c.l.b16 %v270
        %v340 = vunpack.c.l.b16 %v271
        %v341 = vunpack.c.h.b16 %v271
        %v342 = vunpack.c.l.b16 %v272
        %v343 = vunpack.c.l.b16 %v273
        %v344 = vunpack.c.h.b16 %v273
        %v345 = vunpack.c.l.b16 %v274
        %v346 = vunpack.c.l.b16 %v275
        %v347 = vunpack.c.h.b16 %v275
        %v348 = vunpack.c.l.b16 %v276
        %v349 = vunpack.c.l.b16 %v277
        %v350 = vunpack.c.h.b16 %v277
        %v351 = vunpack.c.l.b16 %v278
        %v352 = vunpack.c.l.b16 %v279
        %v353 = vunpack.c.h.b16 %v279
        %v354 = vunpack.c.l.b16 %v280
        %v355 = vunpack.c.l.b16 %v281
        %v356 = vunpack.c.h.b16 %v281
        %v357 = vunpack.c.l.b16 %v282
        %v358 = vunpack.c.l.b16 %v283
        %v359 = vunpack.c.h.b16 %v283
        %v360 = vunpack.c.l.b16 %v284
        %v361 = vunpack.c.l.b16 %v285
        %v362 = vunpack.c.h.b16 %v285
        %v363 = vunpack.c.l.b16 %v286
        %v364 = vunpack.c.l.b16 %v287
        %v365 = vunpack.c.h.b16 %v287
        %v366 = vunpack.c.l.b16 %v288
        %v367 = vunpack.c.l.b16 %v289
        %v368 = vunpack.c.h.b16 %v289
        %v369 = vunpack.c.l.b16 %v290
        %v370 = vunpack.c.l.b16 %v291
        %v371 = vunpack.c.h.b16 %v291
        %v372 = vunpack.c.l.b16 %v292
        %v373 = vpack.c.b16 %v328, %v325
        %v374 = vpack.c.b16 %v329, %v326
        %v375 = vpack.c.b16 %v330, %v327
        %v376 = vpack.c.b16 %v334, %v331
        %v377 = vpack.c.b16 %v335, %v332
        %v378 = vpack.c.b16 %v336, %v333
        %v379 = vpack.c.b16 %v340, %v337
        %v380 = vpack.c.b16 %v341, %v338
        %v381 = vpack.c.b16 %v342, %v339
        %v382 = vpack.c.b16 %v346, %v343
        %v383 = vpack.c.b16 %v347, %v344
        %v384 = vpack.c.b16 %v348, %v345
        %v385 = vpack.c.b16 %v352, %v349
        %v386 = vpack.c.b16 %v353, %v350
        %v387 = vpack.c.b16 %v354, %v351
        %v388 = vpack.c.b16 %v358, %v355
        %v389 = vpack.c.b16 %v359, %v356
        %v390 = vpack.c.b16 %v360, %v357
        %v391 = vpack.c.b16 %v364, %v361
        %v392 = vpack.c.b16 %v365, %v362
        %v393 = vpack.c.b16 %v366, %v363
        %v394 = vpack.c.b16 %v370, %v367
        %v395 = vpack.c.b16 %v371, %v368
        %v396 = vpack.c.b16 %v372, %v369
        %421 = vmatprep.subr.bf16.mxu0 %v374
        %422 = vmatpush1.bf16.msra.mxu0 %v373
        %423 = vmatprep.subr.bf16.mxu0 %v377
        %424 = vmatpush1.bf16.msra.mxu0 %v376
        %425 = vmatprep.subr.bf16.mxu0 %v380
        %426 = vmatpush1.bf16.msra.mxu0 %v379
        %427 = vmatprep.subr.bf16.mxu0 %v383
        %428 = vmatpush1.bf16.msra.mxu0 %v382
        %429 = vmatprep.subr.bf16.mxu0 %v386
        %430 = vmatpush1.bf16.msra.mxu0 %v385
        %431 = vmatprep.subr.bf16.mxu0 %v389
        %432 = vmatpush1.bf16.msra.mxu0 %v388
        %433 = vmatprep.subr.bf16.mxu0 %v392
        %434 = vmatpush1.bf16.msra.mxu0 %v391
        %435 = vmatprep.subr.bf16.mxu0 %v395
        %436 = vmatpush1.bf16.msra.mxu0 %v394
        %437 = vmatprep.subr.bf16.mxu0 0
        %438 = vmatpush1.bf16.msra.mxu0 0
        %439 = vmatprep.subr.bf16.mxu0 0
        %440 = vmatpush1.bf16.msra.mxu0 0
        %441 = vmatprep.subr.bf16.mxu0 0
        %442 = vmatpush1.bf16.msra.mxu0 0
        %443 = vmatprep.subr.bf16.mxu0 0
        %444 = vmatpush1.bf16.msra.mxu0 0
        %445 = vmatprep.subr.bf16.mxu0 0
        %446 = vmatpush1.bf16.msra.mxu0 0
        %447 = vmatprep.subr.bf16.mxu0 0
        %448 = vmatpush1.bf16.msra.mxu0 0
        %449 = vmatprep.subr.bf16.mxu0 0
        %450 = vmatpush1.bf16.msra.mxu0 0
        %451 = vmatprep.subr.bf16.mxu0 0
        %452 = vmatpush1.bf16.msra.mxu0 0
        %453 = vmatprep.mubr.bf16.mxu0 0
        %454 = vmatmul.mubr.bf16.gmra.mrb[0].mxu0 %v260
        %v455 = vpop.f32.mrb[0].mxu0
        %v456 = vadd.f32 0.0, %v455
        %v457 = vpop.f32.mrb[0].mxu0
        %v458 = vadd.f32 0.0, %v457
        %v459 = vpop.f32.mrb[0].mxu0
        %v460 = vadd.f32 0.0, %v459
        %v461 = vpop.f32.mrb[0].mxu0
        %v462 = vadd.f32 0.0, %v461
        %463 = vdwg.mxu0
        %464 = vmatprep.subr.bf16.mxu0 0
        %465 = vmatpush1.bf16.msra.mxu0 %v375
        %466 = vmatprep.subr.bf16.mxu0 0
        %467 = vmatpush1.bf16.msra.mxu0 %v378
        %468 = vmatprep.subr.bf16.mxu0 0
        %469 = vmatpush1.bf16.msra.mxu0 %v381
        %470 = vmatprep.subr.bf16.mxu0 0
        %471 = vmatpush1.bf16.msra.mxu0 %v384
        %472 = vmatprep.subr.bf16.mxu0 0
        %473 = vmatpush1.bf16.msra.mxu0 %v387
        %474 = vmatprep.subr.bf16.mxu0 0
        %475 = vmatpush1.bf16.msra.mxu0 %v390
        %476 = vmatprep.subr.bf16.mxu0 0
        %477 = vmatpush1.bf16.msra.mxu0 %v393
        %478 = vmatprep.subr.bf16.mxu0 0
        %479 = vmatpush1.bf16.msra.mxu0 %v396
        %480 = vmatprep.subr.bf16.mxu0 0
        %481 = vmatpush1.bf16.msra.mxu0 0
        %482 = vmatprep.subr.bf16.mxu0 0
        %483 = vmatpush1.bf16.msra.mxu0 0
        %484 = vmatprep.subr.bf16.mxu0 0
        %485 = vmatpush1.bf16.msra.mxu0 0
        %486 = vmatprep.subr.bf16.mxu0 0
        %487 = vmatpush1.bf16.msra.mxu0 0
        %488 = vmatprep.subr.bf16.mxu0 0
        %489 = vmatpush1.bf16.msra.mxu0 0
        %490 = vmatprep.subr.bf16.mxu0 0
        %491 = vmatpush1.bf16.msra.mxu0 0
        %492 = vmatprep.subr.bf16.mxu0 0
        %493 = vmatpush1.bf16.msra.mxu0 0
        %494 = vmatprep.subr.bf16.mxu0 0
        %495 = vmatpush1.bf16.msra.mxu0 0
        %496 = vmatprep.mubr.bf16.mxu0 0
        %497 = vmatmul.mubr.bf16.gmra.mrb[0].mxu0 %v260
        %v498 = vpop.f32.mrb[0].mxu0
        %v499 = vadd.f32 0.0, %v498
        %v500 = vpop.f32.mrb[0].mxu0
        %v501 = vpop.f32.mrb[0].mxu0
        %v502 = vadd.f32 0.0, %v501
        %v503 = vpop.f32.mrb[0].mxu0
        %504 = vdwg.mxu0
        %v505 = vld [vmem:[#allocation5 + $0x1c] sm:$0xf]
        %v506 = vld [vmem:[#allocation5 + $0x3c] sm:$0xf]
        %v507 = vld [vmem:[#allocation5 + $0x5c] sm:$0xf]
        %v508 = vld [vmem:[#allocation5 + $0x7c] sm:$0xf]
        %v509 = vld [vmem:[#allocation5 + $0x9c] sm:$0xf]
        %v510 = vld [vmem:[#allocation5 + $0xbc] sm:$0xf]
        %v511 = vld [vmem:[#allocation5 + $0xdc] sm:$0xf]
        %v512 = vld [vmem:[#allocation5 + $0xfc] sm:$0xf]
        %v513 = vld [vmem:[#allocation5 + $0x11c] sm:$0xf]
        %v514 = vld [vmem:[#allocation5 + $0x13c] sm:$0xf]
        %v515 = vld [vmem:[#allocation5 + $0x15c] sm:$0xf]
        %v516 = vld [vmem:[#allocation5 + $0x17c] sm:$0xf]
        %v517 = vld [vmem:[#allocation5 + $0x19c] sm:$0xf]
        %v518 = vld [vmem:[#allocation5 + $0x1bc] sm:$0xf]
        %v519 = vld [vmem:[#allocation5 + $0x1dc] sm:$0xf]
        %v520 = vld [vmem:[#allocation5 + $0x1fc] sm:$0xf]
        %v521 = vpack.c.bf16 %v462, %v458
        %v538 = vunpack.c.l.b16 %v505
        %v539 = vunpack.c.l.b16 %v506
        %v540 = vunpack.c.l.b16 %v507
        %v541 = vunpack.c.l.b16 %v508
        %v542 = vunpack.c.l.b16 %v509
        %v543 = vunpack.c.l.b16 %v510
        %v544 = vunpack.c.l.b16 %v511
        %v545 = vunpack.c.l.b16 %v512
        %v546 = vunpack.c.l.b16 %v513
        %v547 = vunpack.c.l.b16 %v514
        %v548 = vunpack.c.l.b16 %v515
        %v549 = vunpack.c.l.b16 %v516
        %v550 = vunpack.c.l.b16 %v517
        %v551 = vunpack.c.l.b16 %v518
        %v552 = vunpack.c.l.b16 %v519
        %v553 = vunpack.c.l.b16 %v520
        %v554 = vpack.c.b16 %v539, %v538
        %v555 = vpack.c.b16 %v541, %v540
        %v556 = vpack.c.b16 %v543, %v542
        %v557 = vpack.c.b16 %v545, %v544
        %v558 = vpack.c.b16 %v547, %v546
        %v559 = vpack.c.b16 %v549, %v548
        %v560 = vpack.c.b16 %v551, %v550
        %v561 = vpack.c.b16 %v553, %v552
        %v570 = vmul.bf16 %v521, %v554
        %v571 = vmul.bf16 %v521, %v555
        %v572 = vmul.bf16 %v521, %v556
        %v573 = vmul.bf16 %v521, %v557
        %v574 = vmul.bf16 %v521, %v558
        %v575 = vmul.bf16 %v521, %v559
        %v576 = vmul.bf16 %v521, %v560
        %v577 = vmul.bf16 %v521, %v561
        %v578 = vpack.c.bf16 %v502, %v499
        %v579 = vmul.bf16 %v578, %v554
        %v580 = vmul.bf16 %v578, %v555
        %v581 = vmul.bf16 %v578, %v556
        %v582 = vmul.bf16 %v578, %v557
        %v583 = vmul.bf16 %v578, %v558
        %v584 = vmul.bf16 %v578, %v559
        %v585 = vmul.bf16 %v578, %v560
        %v586 = vmul.bf16 %v578, %v561
        %v587 = vpack.c.bf16 %v460, %v456
        %588 = vmatprep.subr.bf16.mxu0 0
        %589 = vmatpush1.bf16.xpose.msra.mxu0 %v570
        %590 = vmatprep.subr.bf16.mxu0 0
        %591 = vmatpush1.bf16.xpose.msra.mxu0 %v571
        %592 = vmatprep.subr.bf16.mxu0 0
        %593 = vmatpush1.bf16.xpose.msra.mxu0 %v572
        %594 = vmatprep.subr.bf16.mxu0 0
        %595 = vmatpush1.bf16.xpose.msra.mxu0 %v573
        %596 = vmatprep.subr.bf16.mxu0 0
        %597 = vmatpush1.bf16.xpose.msra.mxu0 %v574
        %598 = vmatprep.subr.bf16.mxu0 0
        %599 = vmatpush1.bf16.xpose.msra.mxu0 %v575
        %600 = vmatprep.subr.bf16.mxu0 0
        %601 = vmatpush1.bf16.xpose.msra.mxu0 %v576
        %602 = vmatprep.subr.bf16.mxu0 0
        %603 = vmatpush1.bf16.xpose.msra.mxu0 %v577
        %604 = vmatprep.subr.bf16.mxu0 0
        %605 = vmatpush1.bf16.xpose.msra.mxu0 0
        %606 = vmatprep.subr.bf16.mxu0 0
        %607 = vmatpush1.bf16.xpose.msra.mxu0 0
        %608 = vmatprep.subr.bf16.mxu0 0
        %609 = vmatpush1.bf16.xpose.msra.mxu0 0
        %610 = vmatprep.subr.bf16.mxu0 0
        %611 = vmatpush1.bf16.xpose.msra.mxu0 0
        %612 = vmatprep.subr.bf16.mxu0 0
        %613 = vmatpush1.bf16.xpose.msra.mxu0 0
        %614 = vmatprep.subr.bf16.mxu0 0
        %615 = vmatpush1.bf16.xpose.msra.mxu0 0
        %616 = vmatprep.subr.bf16.mxu0 0
        %617 = vmatpush1.bf16.xpose.msra.mxu0 0
        %618 = vmatprep.subr.bf16.mxu0 0
        %619 = vmatpush1.bf16.xpose.msra.mxu0 0
        %620 = vmatprep.mubr.bf16.mxu0 0
        %621 = vmatmul.mubr.bf16.gmra.mrb[0].mxu0 %v587
        %v622 = vpop.f32.mrb[0].mxu0
        %v623 = vadd.f32 0.0, %v622
        %v624 = vpop.f32.mrb[0].mxu0
        %v625 = vpop.f32.mrb[0].mxu0
        %v626 = vadd.f32 0.0, %v625
        %v627 = vpop.f32.mrb[0].mxu0
        %628 = vdwg.mxu0
        %629 = vmax.xlane.f32.xlu0 %v623
        %v630 = vpop.xlane.xlu0 %629
        %631 = vmax.xlane.f32.xlu0 %v626
        %v632 = vpop.xlane.xlu0 %631
        %v633 = vsub.f32 %v623, %v630
        %v634 = vsub.f32 %v626, %v632
        %v635 = vmul.f32 %v633, 1.442695
        %v636 = vpow.pop %v635
        %v637 = vmul.f32 %v634, 1.442695
        %v638 = vpow.pop %v637
        %v639 = vpack.c.bf16 %v638, %v636
        %640 = vmatprep.subr.bf16.mxu0 0
        %641 = vmatpush1.bf16.msra.mxu0 %v554
        %642 = vmatprep.subr.bf16.mxu0 0
        %643 = vmatpush1.bf16.msra.mxu0 %v555
        %644 = vmatprep.subr.bf16.mxu0 0
        %645 = vmatpush1.bf16.msra.mxu0 %v556
        %646 = vmatprep.subr.bf16.mxu0 0
        %647 = vmatpush1.bf16.msra.mxu0 %v557
        %648 = vmatprep.subr.bf16.mxu0 0
        %649 = vmatpush1.bf16.msra.mxu0 %v558
        %650 = vmatprep.subr.bf16.mxu0 0
        %651 = vmatpush1.bf16.msra.mxu0 %v559
        %652 = vmatprep.subr.bf16.mxu0 0
        %653 = vmatpush1.bf16.msra.mxu0 %v560
        %654 = vmatprep.subr.bf16.mxu0 0
        %655 = vmatpush1.bf16.msra.mxu0 %v561
        %656 = vmatprep.subr.bf16.mxu0 0
        %657 = vmatpush1.bf16.msra.mxu0 0
        %658 = vmatprep.subr.bf16.mxu0 0
        %659 = vmatpush1.bf16.msra.mxu0 0
        %660 = vmatprep.subr.bf16.mxu0 0
        %661 = vmatpush1.bf16.msra.mxu0 0
        %662 = vmatprep.subr.bf16.mxu0 0
        %663 = vmatpush1.bf16.msra.mxu0 0
        %664 = vmatprep.subr.bf16.mxu0 0
        %665 = vmatpush1.bf16.msra.mxu0 0
        %666 = vmatprep.subr.bf16.mxu0 0
        %667 = vmatpush1.bf16.msra.mxu0 0
        %668 = vmatprep.subr.bf16.mxu0 0
        %669 = vmatpush1.bf16.msra.mxu0 0
        %670 = vmatprep.subr.bf16.mxu0 0
        %671 = vmatpush1.bf16.msra.mxu0 0
        %672 = vmatprep.mubr.bf16.mxu0 0
        %673 = vmatmul.mubr.bf16.gmra.mrb[0].mxu0 %v639
        %v674 = vpop.f32.mrb[0].mxu0
        %v675 = vadd.f32 0.0, %v674
        %v676 = vpop.f32.mrb[0].mxu0
        %v677 = vpop.f32.mrb[0].mxu0
        %v678 = vadd.f32 0.0, %v677
        %v679 = vpop.f32.mrb[0].mxu0
        %680 = vdwg.mxu0
        %v681 = vrcp.pop %v675
        %v682 = vmul.f32 %v636, %v681
        %v683 = vrcp.pop %v678
        %v684 = vmul.f32 %v638, %v683
        %v685 = vpack.c.bf16 %v684, %v682
        %686 = vmatprep.subr.bf16.mxu0 0
        %687 = vmatpush1.bf16.msra.mxu0 %v579
        %688 = vmatprep.subr.bf16.mxu0 0
        %689 = vmatpush1.bf16.msra.mxu0 %v580
        %690 = vmatprep.subr.bf16.mxu0 0
        %691 = vmatpush1.bf16.msra.mxu0 %v581
        %692 = vmatprep.subr.bf16.mxu0 0
        %693 = vmatpush1.bf16.msra.mxu0 %v582
        %694 = vmatprep.subr.bf16.mxu0 0
        %695 = vmatpush1.bf16.msra.mxu0 %v583
        %696 = vmatprep.subr.bf16.mxu0 0
        %697 = vmatpush1.bf16.msra.mxu0 %v584
        %698 = vmatprep.subr.bf16.mxu0 0
        %699 = vmatpush1.bf16.msra.mxu0 %v585
        %700 = vmatprep.subr.bf16.mxu0 0
        %701 = vmatpush1.bf16.msra.mxu0 %v586
        %702 = vmatprep.subr.bf16.mxu0 0
        %703 = vmatpush1.bf16.msra.mxu0 0
        %704 = vmatprep.subr.bf16.mxu0 0
        %705 = vmatpush1.bf16.msra.mxu0 0
        %706 = vmatprep.subr.bf16.mxu0 0
        %707 = vmatpush1.bf16.msra.mxu0 0
        %708 = vmatprep.subr.bf16.mxu0 0
        %709 = vmatpush1.bf16.msra.mxu0 0
        %710 = vmatprep.subr.bf16.mxu0 0
        %711 = vmatpush1.bf16.msra.mxu0 0
        %712 = vmatprep.subr.bf16.mxu0 0
        %713 = vmatpush1.bf16.msra.mxu0 0
        %714 = vmatprep.subr.bf16.mxu0 0
        %715 = vmatpush1.bf16.msra.mxu0 0
        %716 = vmatprep.subr.bf16.mxu0 0
        %717 = vmatpush1.bf16.msra.mxu0 0
        %718 = vmatprep.mubr.bf16.mxu0 0
        %719 = vmatmul.mubr.bf16.gmra.mrb[0].mxu0 %v685
        %v720 = vpop.f32.mrb[0].mxu0
        %v721 = vadd.f32 0.0, %v720
        %v722 = vpop.f32.mrb[0].mxu0
        %v723 = vpop.f32.mrb[0].mxu0
        %v724 = vadd.f32 0.0, %v723
        %v725 = vpop.f32.mrb[0].mxu0
        %726 = vdwg.mxu0
        %v727 = vpack.c.bf16 %v724, %v721
        %v728 = vld [vmem:[#allocation5 + $0xc] sm:$0xf]
        %v729 = vld [vmem:[#allocation5 + $0x2c] sm:$0xf]
        %v730 = vld [vmem:[#allocation5 + $0x4c] sm:$0xf]
        %v731 = vld [vmem:[#allocation5 + $0x6c] sm:$0xf]
        %v732 = vld [vmem:[#allocation5 + $0x8c] sm:$0xf]
        %v733 = vld [vmem:[#allocation5 + $0xac] sm:$0xf]
        %v734 = vld [vmem:[#allocation5 + $0xcc] sm:$0xf]
        %v735 = vld [vmem:[#allocation5 + $0xec] sm:$0xf]
        %v736 = vld [vmem:[#allocation5 + $0x10c] sm:$0xf]
        %v737 = vld [vmem:[#allocation5 + $0x12c] sm:$0xf]
        %v738 = vld [vmem:[#allocation5 + $0x14c] sm:$0xf]
        %v739 = vld [vmem:[#allocation5 + $0x16c] sm:$0xf]
        %v740 = vld [vmem:[#allocation5 + $0x18c] sm:$0xf]
        %v741 = vld [vmem:[#allocation5 + $0x1ac] sm:$0xf]
        %v742 = vld [vmem:[#allocation5 + $0x1cc] sm:$0xf]
        %v743 = vld [vmem:[#allocation5 + $0x1ec] sm:$0xf]
        %v744 = vlaneseq
        %v745 = vshrl.u32 %v744, 7
        %v746 = vsub.s32 2, %v745
        %v747 = vrot.slane %v223, %v746
        %v764 = vunpack.c.l.b16 %v728
        %v765 = vunpack.c.l.b16 %v729
        %v766 = vunpack.c.l.b16 %v730
        %v767 = vunpack.c.l.b16 %v731
        %v768 = vunpack.c.l.b16 %v732
        %v769 = vunpack.c.l.b16 %v733
        %v770 = vunpack.c.l.b16 %v734
        %v771 = vunpack.c.l.b16 %v735
        %v772 = vunpack.c.l.b16 %v736
        %v773 = vunpack.c.l.b16 %v737
        %v774 = vunpack.c.l.b16 %v738
        %v775 = vunpack.c.l.b16 %v739
        %v776 = vunpack.c.l.b16 %v740
        %v777 = vunpack.c.l.b16 %v741
        %v778 = vunpack.c.l.b16 %v742
        %v779 = vunpack.c.l.b16 %v743
        %v780 = vpack.c.b16 %v765, %v764
        %v781 = vpack.c.b16 %v767, %v766
        %v782 = vpack.c.b16 %v769, %v768
        %v783 = vpack.c.b16 %v771, %v770
        %v784 = vpack.c.b16 %v773, %v772
        %v785 = vpack.c.b16 %v775, %v774
        %v786 = vpack.c.b16 %v777, %v776
        %v787 = vpack.c.b16 %v779, %v778
        %796 = vmatprep.subr.bf16.mxu0 0
        %797 = vmatpush1.bf16.msra.mxu0 %v780
        %798 = vmatprep.subr.bf16.mxu0 0
        %799 = vmatpush1.bf16.msra.mxu0 %v781
        %800 = vmatprep.subr.bf16.mxu0 0
        %801 = vmatpush1.bf16.msra.mxu0 %v782
        %802 = vmatprep.subr.bf16.mxu0 0
        %803 = vmatpush1.bf16.msra.mxu0 %v783
        %804 = vmatprep.subr.bf16.mxu0 0
        %805 = vmatpush1.bf16.msra.mxu0 %v784
        %806 = vmatprep.subr.bf16.mxu0 0
        %807 = vmatpush1.bf16.msra.mxu0 %v785
        %808 = vmatprep.subr.bf16.mxu0 0
        %809 = vmatpush1.bf16.msra.mxu0 %v786
        %810 = vmatprep.subr.bf16.mxu0 0
        %811 = vmatpush1.bf16.msra.mxu0 %v787
        %812 = vmatprep.subr.bf16.mxu0 0
        %813 = vmatpush1.bf16.msra.mxu0 0
        %814 = vmatprep.subr.bf16.mxu0 0
        %815 = vmatpush1.bf16.msra.mxu0 0
        %816 = vmatprep.subr.bf16.mxu0 0
        %817 = vmatpush1.bf16.msra.mxu0 0
        %818 = vmatprep.subr.bf16.mxu0 0
        %819 = vmatpush1.bf16.msra.mxu0 0
        %820 = vmatprep.subr.bf16.mxu0 0
        %821 = vmatpush1.bf16.msra.mxu0 0
        %822 = vmatprep.subr.bf16.mxu0 0
        %823 = vmatpush1.bf16.msra.mxu0 0
        %824 = vmatprep.subr.bf16.mxu0 0
        %825 = vmatpush1.bf16.msra.mxu0 0
        %826 = vmatprep.subr.bf16.mxu0 0
        %827 = vmatpush1.bf16.msra.mxu0 0
        %828 = vmatprep.mubr.bf16.mxu0 0
        %829 = vmatmul.mubr.bf16.gmra.mrb[0].mxu0 %v727
        %v830 = vpop.f32.mrb[0].mxu0
        %v831 = vadd.f32 %v747, %v830
        %v832 = vpop.f32.mrb[0].mxu0
        %v833 = vpop.f32.mrb[0].mxu0
        %v834 = vadd.f32 %v747, %v833
        %v835 = vpop.f32.mrb[0].mxu0
        %836 = vdwg.mxu0
        %v837 = vlaneseq
        %v838 = vshrl.u32 %v837, 7
        %v839 = vsub.s32 3, %v838
        %v840 = vrot.slane %v223, %v839
        %v841 = vmul.f32 %v840, %v831
        %v842 = vmul.f32 %v840, %v834
        %v843 = vadd.f32 %v221, %v841
        %v844 = vadd.f32 %v222, %v842
        %845 = vadd.xlane.f32.xlu0 %v843
        %v846 = vpop.xlane.xlu0 %845
        %847 = vadd.xlane.f32.xlu0 %v844
        %v848 = vpop.xlane.xlu0 %847
        %v849 = vmul.f32 %v846, %v229
        %v850 = vmul.f32 %v848, %v229
        %v851 = vsub.f32 %v843, %v849
        %v852 = vsub.f32 %v844, %v850
        %v853 = vmul.f32 %v851, %v851
        %v854 = vmul.f32 %v852, %v852
        %855 = vadd.xlane.f32.xlu0 %v853
        %v856 = vpop.xlane.xlu0 %855
        %857 = vadd.xlane.f32.xlu0 %v854
        %v858 = vpop.xlane.xlu0 %857
        %v859 = vmul.f32 %v856, %v229
        %v860 = vmul.f32 %v858, %v229
        %v861 = vadd.f32 %v859, 1e-06
        %v862 = vadd.f32 %v860, 1e-06
        %v863 = vrsqrt.pop %v861
        %v864 = vrsqrt.pop %v862
        %v865 = vmul.f32 %v851, %v863
        %v866 = vmul.f32 %v852, %v864
        %v867 = vlaneseq
        %v868 = vshrl.u32 %v867, 7
        %v869 = vsub.s32 4, %v868
        %v870 = vrot.slane %v223, %v869
        %v871 = vmul.f32 %v865, %v870
        %v872 = vmul.f32 %v866, %v870
        %v873 = vlaneseq
        %v874 = vshrl.u32 %v873, 7
        %v875 = vsub.s32 5, %v874
        %v876 = vrot.slane %v223, %v875
        %v877 = vadd.f32 %v871, %v876
        %v878 = vadd.f32 %v872, %v876
        %v879 = vpack.c.bf16 %v878, %v877
        %v880 = vld [vmem:[#allocation5 + $0x10] sm:$0xf]
        %v881 = vld [vmem:[#allocation5 + $0x30] sm:$0xf]
        %v882 = vld [vmem:[#allocation5 + $0x50] sm:$0xf]
        %v883 = vld [vmem:[#allocation5 + $0x70] sm:$0xf]
        %v884 = vld [vmem:[#allocation5 + $0x90] sm:$0xf]
        %v885 = vld [vmem:[#allocation5 + $0xb0] sm:$0xf]
        %v886 = vld [vmem:[#allocation5 + $0xd0] sm:$0xf]
        %v887 = vld [vmem:[#allocation5 + $0xf0] sm:$0xf]
        %v888 = vld [vmem:[#allocation5 + $0x110] sm:$0xf]
        %v889 = vld [vmem:[#allocation5 + $0x130] sm:$0xf]
        %v890 = vld [vmem:[#allocation5 + $0x150] sm:$0xf]
        %v891 = vld [vmem:[#allocation5 + $0x170] sm:$0xf]
        %v892 = vld [vmem:[#allocation5 + $0x190] sm:$0xf]
        %v893 = vld [vmem:[#allocation5 + $0x1b0] sm:$0xf]
        %v894 = vld [vmem:[#allocation5 + $0x1d0] sm:$0xf]
        %v895 = vld [vmem:[#allocation5 + $0x1f0] sm:$0xf]
        %v896 = vlaneseq
        %v897 = vshrl.u32 %v896, 7
        %v898 = vsub.s32 6, %v897
        %v899 = vrot.slane %v223, %v898
        %v916 = vunpack.c.l.b16 %v880
        %v917 = vunpack.c.l.b16 %v881
        %v918 = vunpack.c.l.b16 %v882
        %v919 = vunpack.c.l.b16 %v883
        %v920 = vunpack.c.l.b16 %v884
        %v921 = vunpack.c.l.b16 %v885
        %v922 = vunpack.c.l.b16 %v886
        %v923 = vunpack.c.l.b16 %v887
        %v924 = vunpack.c.l.b16 %v888
        %v925 = vunpack.c.l.b16 %v889
        %v926 = vunpack.c.l.b16 %v890
        %v927 = vunpack.c.l.b16 %v891
        %v928 = vunpack.c.l.b16 %v892
        %v929 = vunpack.c.l.b16 %v893
        %v930 = vunpack.c.l.b16 %v894
        %v931 = vunpack.c.l.b16 %v895
        %v932 = vpack.c.b16 %v917, %v916
        %v933 = vpack.c.b16 %v919, %v918
        %v934 = vpack.c.b16 %v921, %v920
        %v935 = vpack.c.b16 %v923, %v922
        %v936 = vpack.c.b16 %v925, %v924
        %v937 = vpack.c.b16 %v927, %v926
        %v938 = vpack.c.b16 %v929, %v928
        %v939 = vpack.c.b16 %v931, %v930
        %948 = vmatprep.subr.bf16.mxu0 0
        %949 = vmatpush1.bf16.msra.mxu0 %v932
        %950 = vmatprep.subr.bf16.mxu0 0
        %951 = vmatpush1.bf16.msra.mxu0 %v933
        %952 = vmatprep.subr.bf16.mxu0 0
        %953 = vmatpush1.bf16.msra.mxu0 %v934
        %954 = vmatprep.subr.bf16.mxu0 0
        %955 = vmatpush1.bf16.msra.mxu0 %v935
        %956 = vmatprep.subr.bf16.mxu0 0
        %957 = vmatpush1.bf16.msra.mxu0 %v936
        %958 = vmatprep.subr.bf16.mxu0 0
        %959 = vmatpush1.bf16.msra.mxu0 %v937
        %960 = vmatprep.subr.bf16.mxu0 0
        %961 = vmatpush1.bf16.msra.mxu0 %v938
        %962 = vmatprep.subr.bf16.mxu0 0
        %963 = vmatpush1.bf16.msra.mxu0 %v939
        %964 = vmatprep.subr.bf16.mxu0 0
        %965 = vmatpush1.bf16.msra.mxu0 0
        %966 = vmatprep.subr.bf16.mxu0 0
        %967 = vmatpush1.bf16.msra.mxu0 0
        %968 = vmatprep.subr.bf16.mxu0 0
        %969 = vmatpush1.bf16.msra.mxu0 0
        %970 = vmatprep.subr.bf16.mxu0 0
        %971 = vmatpush1.bf16.msra.mxu0 0
        %972 = vmatprep.subr.bf16.mxu0 0
        %973 = vmatpush1.bf16.msra.mxu0 0
        %974 = vmatprep.subr.bf16.mxu0 0
        %975 = vmatpush1.bf16.msra.mxu0 0
        %976 = vmatprep.subr.bf16.mxu0 0
        %977 = vmatpush1.bf16.msra.mxu0 0
        %978 = vmatprep.subr.bf16.mxu0 0
        %979 = vmatpush1.bf16.msra.mxu0 0
        %980 = vmatprep.mubr.bf16.mxu0 0
        %981 = vmatmul.mubr.bf16.gmra.mrb[0].mxu0 %v879
        %v982 = vpop.f32.mrb[0].mxu0
        %v983 = vadd.f32 %v899, %v982
        %v984 = vpop.f32.mrb[0].mxu0
        %v985 = vpop.f32.mrb[0].mxu0
        %v986 = vadd.f32 %v899, %v985
        %v987 = vpop.f32.mrb[0].mxu0
        %988 = vdwg.mxu0
        %989 = vadd.xlane.f32.xlu0 %v983
        %v990 = vpop.xlane.xlu0 %989
        %991 = vadd.xlane.f32.xlu0 %v986
        %v992 = vpop.xlane.xlu0 %991
        %v993 = vmul.f32 %v990, 0.03125
        %v994 = vmul.f32 %v992, 0.03125
        %v995 = vsub.f32 %v983, %v993
        %v996 = vsub.f32 %v986, %v994
        %v997 = vlaneseq
        %v998 = vshrl.u32 %v997, 7
        %v999 = vsub.s32 6, %v998
        %v1000 = vrot.slane %v224, %v999
        %v1001 = vmul.f32 %v995, %v1000
        %v1002 = vmul.f32 %v996, %v1000
        %v1003 = vmul.f32 %v1001, %v1001
        %v1004 = vmul.f32 %v1002, %v1002
        %1005 = vadd.xlane.f32.xlu0 %v1003
        %v1006 = vpop.xlane.xlu0 %1005
        %1007 = vadd.xlane.f32.xlu0 %v1004
        %v1008 = vpop.xlane.xlu0 %1007
        %v1009 = vmul.f32 %v1006, 0.03125
        %v1010 = vmul.f32 %v1008, 0.03125
        %v1011 = vadd.f32 %v1009, 1e-06
        %v1012 = vadd.f32 %v1010, 1e-06
        %v1013 = vrsqrt.pop %v1011
        %v1014 = vrsqrt.pop %v1012
        %v1015 = vmul.f32 %v1001, %v1013
        %v1016 = vmul.f32 %v1002, %v1014
        %v1017 = vlaneseq
        %v1018 = vshrl.u32 %v1017, 7
        %v1019 = vsub.s32 7, %v1018
        %v1020 = vrot.slane %v223, %v1019
        %v1021 = vmul.f32 %v1015, %v1020
        %v1022 = vmul.f32 %v1016, %v1020
        %v1023 = vlaneseq
        %v1024 = vshrl.u32 %v1023, 7
        %v1025 = vsub.s32 0, %v1024
        %v1026 = vrot.slane %v224, %v1025
        %v1027 = vadd.f32 %v1021, %v1026
        %v1028 = vadd.f32 %v1022, %v1026
        %v1029 = vmax.f32 %v1027, 0.0
        %v1030 = vmax.f32 %v1028, 0.0
        %v1031 = vpack.c.bf16 %v1030, %v1029
        %v1032 = vld [vmem:[#allocation5 + $0x14] sm:$0xf]
        %v1033 = vld [vmem:[#allocation5 + $0x34] sm:$0xf]
        %v1034 = vld [vmem:[#allocation5 + $0x54] sm:$0xf]
        %v1035 = vld [vmem:[#allocation5 + $0x74] sm:$0xf]
        %v1036 = vld [vmem:[#allocation5 + $0x94] sm:$0xf]
        %v1037 = vld [vmem:[#allocation5 + $0xb4] sm:$0xf]
        %v1038 = vld [vmem:[#allocation5 + $0xd4] sm:$0xf]
        %v1039 = vld [vmem:[#allocation5 + $0xf4] sm:$0xf]
        %v1040 = vld [vmem:[#allocation5 + $0x114] sm:$0xf]
        %v1041 = vld [vmem:[#allocation5 + $0x134] sm:$0xf]
        %v1042 = vld [vmem:[#allocation5 + $0x154] sm:$0xf]
        %v1043 = vld [vmem:[#allocation5 + $0x174] sm:$0xf]
        %v1044 = vld [vmem:[#allocation5 + $0x194] sm:$0xf]
        %v1045 = vld [vmem:[#allocation5 + $0x1b4] sm:$0xf]
        %v1046 = vld [vmem:[#allocation5 + $0x1d4] sm:$0xf]
        %v1047 = vld [vmem:[#allocation5 + $0x1f4] sm:$0xf]
        %v1048 = vlaneseq
        %v1049 = vshrl.u32 %v1048, 7
        %v1050 = vsub.s32 1, %v1049
        %v1051 = vrot.slane %v224, %v1050
        %v1068 = vunpack.c.l.b16 %v1032
        %v1069 = vunpack.c.l.b16 %v1033
        %v1070 = vunpack.c.l.b16 %v1034
        %v1071 = vunpack.c.l.b16 %v1035
        %v1072 = vunpack.c.l.b16 %v1036
        %v1073 = vunpack.c.l.b16 %v1037
        %v1074 = vunpack.c.l.b16 %v1038
        %v1075 = vunpack.c.l.b16 %v1039
        %v1076 = vunpack.c.l.b16 %v1040
        %v1077 = vunpack.c.l.b16 %v1041
        %v1078 = vunpack.c.l.b16 %v1042
        %v1079 = vunpack.c.l.b16 %v1043
        %v1080 = vunpack.c.l.b16 %v1044
        %v1081 = vunpack.c.l.b16 %v1045
        %v1082 = vunpack.c.l.b16 %v1046
        %v1083 = vunpack.c.l.b16 %v1047
        %v1084 = vpack.c.b16 %v1069, %v1068
        %v1085 = vpack.c.b16 %v1071, %v1070
        %v1086 = vpack.c.b16 %v1073, %v1072
        %v1087 = vpack.c.b16 %v1075, %v1074
        %v1088 = vpack.c.b16 %v1077, %v1076
        %v1089 = vpack.c.b16 %v1079, %v1078
        %v1090 = vpack.c.b16 %v1081, %v1080
        %v1091 = vpack.c.b16 %v1083, %v1082
        %1100 = vmatprep.subr.bf16.mxu0 0
        %1101 = vmatpush1.bf16.msra.mxu0 %v1084
        %1102 = vmatprep.subr.bf16.mxu0 0
        %1103 = vmatpush1.bf16.msra.mxu0 %v1085
        %1104 = vmatprep.subr.bf16.mxu0 0
        %1105 = vmatpush1.bf16.msra.mxu0 %v1086
        %1106 = vmatprep.subr.bf16.mxu0 0
        %1107 = vmatpush1.bf16.msra.mxu0 %v1087
        %1108 = vmatprep.subr.bf16.mxu0 0
        %1109 = vmatpush1.bf16.msra.mxu0 %v1088
        %1110 = vmatprep.subr.bf16.mxu0 0
        %1111 = vmatpush1.bf16.msra.mxu0 %v1089
        %1112 = vmatprep.subr.bf16.mxu0 0
        %1113 = vmatpush1.bf16.msra.mxu0 %v1090
        %1114 = vmatprep.subr.bf16.mxu0 0
        %1115 = vmatpush1.bf16.msra.mxu0 %v1091
        %1116 = vmatprep.subr.bf16.mxu0 0
        %1117 = vmatpush1.bf16.msra.mxu0 0
        %1118 = vmatprep.subr.bf16.mxu0 0
        %1119 = vmatpush1.bf16.msra.mxu0 0
        %1120 = vmatprep.subr.bf16.mxu0 0
        %1121 = vmatpush1.bf16.msra.mxu0 0
        %1122 = vmatprep.subr.bf16.mxu0 0
        %1123 = vmatpush1.bf16.msra.mxu0 0
        %1124 = vmatprep.subr.bf16.mxu0 0
        %1125 = vmatpush1.bf16.msra.mxu0 0
        %1126 = vmatprep.subr.bf16.mxu0 0
        %1127 = vmatpush1.bf16.msra.mxu0 0
        %1128 = vmatprep.subr.bf16.mxu0 0
        %1129 = vmatpush1.bf16.msra.mxu0 0
        %1130 = vmatprep.subr.bf16.mxu0 0
        %1131 = vmatpush1.bf16.msra.mxu0 0
        %1132 = vmatprep.mubr.bf16.mxu0 0
        %1133 = vmatmul.mubr.bf16.gmra.mrb[0].mxu0 %v1031
        %v1134 = vpop.f32.mrb[0].mxu0
        %v1135 = vadd.f32 %v1051, %v1134
        %v1136 = vpop.f32.mrb[0].mxu0
        %v1137 = vpop.f32.mrb[0].mxu0
        %v1138 = vadd.f32 %v1051, %v1137
        %v1139 = vpop.f32.mrb[0].mxu0
        %1140 = vdwg.mxu0
        %1141 = vadd.xlane.f32.xlu0 %v1135
        %v1142 = vpop.xlane.xlu0 %1141
        %1143 = vadd.xlane.f32.xlu0 %v1138
        %v1144 = vpop.xlane.xlu0 %1143
        %v1145 = vmul.f32 %v1142, 0.03125
        %v1146 = vmul.f32 %v1144, 0.03125
        %v1147 = vsub.f32 %v1135, %v1145
        %v1148 = vsub.f32 %v1138, %v1146
        %v1149 = vmul.f32 %v1147, %v1000
        %v1150 = vmul.f32 %v1148, %v1000
        %v1151 = vmul.f32 %v1149, %v1149
        %v1152 = vmul.f32 %v1150, %v1150
        %1153 = vadd.xlane.f32.xlu0 %v1151
        %v1154 = vpop.xlane.xlu0 %1153
        %1155 = vadd.xlane.f32.xlu0 %v1152
        %v1156 = vpop.xlane.xlu0 %1155
        %v1157 = vmul.f32 %v1154, 0.03125
        %v1158 = vmul.f32 %v1156, 0.03125
        %v1159 = vadd.f32 %v1157, 1e-06
        %v1160 = vadd.f32 %v1158, 1e-06
        %v1161 = vrsqrt.pop %v1159
        %v1162 = vrsqrt.pop %v1160
        %v1163 = vmul.f32 %v1149, %v1161
        %v1164 = vmul.f32 %v1150, %v1162
        %v1165 = vlaneseq
        %v1166 = vshrl.u32 %v1165, 7
        %v1167 = vsub.s32 2, %v1166
        %v1168 = vrot.slane %v224, %v1167
        %v1169 = vmul.f32 %v1163, %v1168
        %v1170 = vmul.f32 %v1164, %v1168
        %v1171 = vlaneseq
        %v1172 = vshrl.u32 %v1171, 7
        %v1173 = vsub.s32 3, %v1172
        %v1174 = vrot.slane %v224, %v1173
        %v1175 = vadd.f32 %v1169, %v1174
        %v1176 = vadd.f32 %v1170, %v1174
        %v1177 = vmax.f32 %v1175, 0.0
        %v1178 = vmax.f32 %v1176, 0.0
        %v1179 = vpack.c.bf16 %v1178, %v1177
        %v1180 = vld [vmem:[#allocation5 + $0x18] sm:$0xf]
        %v1181 = vld [vmem:[#allocation5 + $0x38] sm:$0xf]
        %v1182 = vld [vmem:[#allocation5 + $0x58] sm:$0xf]
        %v1183 = vld [vmem:[#allocation5 + $0x78] sm:$0xf]
        %v1184 = vld [vmem:[#allocation5 + $0x98] sm:$0xf]
        %v1185 = vld [vmem:[#allocation5 + $0xb8] sm:$0xf]
        %v1186 = vld [vmem:[#allocation5 + $0xd8] sm:$0xf]
        %v1187 = vld [vmem:[#allocation5 + $0xf8] sm:$0xf]
        %v1188 = vld [vmem:[#allocation5 + $0x118] sm:$0xf]
        %v1189 = vld [vmem:[#allocation5 + $0x138] sm:$0xf]
        %v1190 = vld [vmem:[#allocation5 + $0x158] sm:$0xf]
        %v1191 = vld [vmem:[#allocation5 + $0x178] sm:$0xf]
        %v1192 = vld [vmem:[#allocation5 + $0x198] sm:$0xf]
        %v1193 = vld [vmem:[#allocation5 + $0x1b8] sm:$0xf]
        %v1194 = vld [vmem:[#allocation5 + $0x1d8] sm:$0xf]
        %v1195 = vld [vmem:[#allocation5 + $0x1f8] sm:$0xf]
        %v1196 = vlaneseq
        %v1197 = vshrl.u32 %v1196, 7
        %v1198 = vsub.s32 4, %v1197
        %v1199 = vrot.slane %v224, %v1198
        %v1216 = vunpack.c.l.b16 %v1180
        %v1217 = vunpack.c.l.b16 %v1181
        %v1218 = vunpack.c.l.b16 %v1182
        %v1219 = vunpack.c.l.b16 %v1183
        %v1220 = vunpack.c.l.b16 %v1184
        %v1221 = vunpack.c.l.b16 %v1185
        %v1222 = vunpack.c.l.b16 %v1186
        %v1223 = vunpack.c.l.b16 %v1187
        %v1224 = vunpack.c.l.b16 %v1188
        %v1225 = vunpack.c.l.b16 %v1189
        %v1226 = vunpack.c.l.b16 %v1190
        %v1227 = vunpack.c.l.b16 %v1191
        %v1228 = vunpack.c.l.b16 %v1192
        %v1229 = vunpack.c.l.b16 %v1193
        %v1230 = vunpack.c.l.b16 %v1194
        %v1231 = vunpack.c.l.b16 %v1195
        %v1232 = vpack.c.b16 %v1217, %v1216
        %v1233 = vpack.c.b16 %v1219, %v1218
        %v1234 = vpack.c.b16 %v1221, %v1220
        %v1235 = vpack.c.b16 %v1223, %v1222
        %v1236 = vpack.c.b16 %v1225, %v1224
        %v1237 = vpack.c.b16 %v1227, %v1226
        %v1238 = vpack.c.b16 %v1229, %v1228
        %v1239 = vpack.c.b16 %v1231, %v1230
        %1248 = vmatprep.subr.bf16.mxu0 0
        %1249 = vmatpush1.bf16.msra.mxu0 %v1232
        %1250 = vmatprep.subr.bf16.mxu0 0
        %1251 = vmatpush1.bf16.msra.mxu0 %v1233
        %1252 = vmatprep.subr.bf16.mxu0 0
        %1253 = vmatpush1.bf16.msra.mxu0 %v1234
        %1254 = vmatprep.subr.bf16.mxu0 0
        %1255 = vmatpush1.bf16.msra.mxu0 %v1235
        %1256 = vmatprep.subr.bf16.mxu0 0
        %1257 = vmatpush1.bf16.msra.mxu0 %v1236
        %1258 = vmatprep.subr.bf16.mxu0 0
        %1259 = vmatpush1.bf16.msra.mxu0 %v1237
        %1260 = vmatprep.subr.bf16.mxu0 0
        %1261 = vmatpush1.bf16.msra.mxu0 %v1238
        %1262 = vmatprep.subr.bf16.mxu0 0
        %1263 = vmatpush1.bf16.msra.mxu0 %v1239
        %1264 = vmatprep.subr.bf16.mxu0 0
        %1265 = vmatpush1.bf16.msra.mxu0 0
        %1266 = vmatprep.subr.bf16.mxu0 0
        %1267 = vmatpush1.bf16.msra.mxu0 0
        %1268 = vmatprep.subr.bf16.mxu0 0
        %1269 = vmatpush1.bf16.msra.mxu0 0
        %1270 = vmatprep.subr.bf16.mxu0 0
        %1271 = vmatpush1.bf16.msra.mxu0 0
        %1272 = vmatprep.subr.bf16.mxu0 0
        %1273 = vmatpush1.bf16.msra.mxu0 0
        %1274 = vmatprep.subr.bf16.mxu0 0
        %1275 = vmatpush1.bf16.msra.mxu0 0
        %1276 = vmatprep.subr.bf16.mxu0 0
        %1277 = vmatpush1.bf16.msra.mxu0 0
        %1278 = vmatprep.subr.bf16.mxu0 0
        %1279 = vmatpush1.bf16.msra.mxu0 0
        %1280 = vmatprep.mubr.bf16.mxu0 0
        %1281 = vmatmul.mubr.bf16.gmra.mrb[0].mxu0 %v1179
        %v1282 = vpop.f32.mrb[0].mxu0
        %v1283 = vadd.f32 %v1199, %v1282
        %v1284 = vpop.f32.mrb[0].mxu0
        %v1285 = vpop.f32.mrb[0].mxu0
        %v1286 = vadd.f32 %v1199, %v1285
        %v1287 = vpop.f32.mrb[0].mxu0
        %1288 = vdwg.mxu0
        %v1289 = vlaneseq
        %v1290 = vshrl.u32 %v1289, 7
        %v1291 = vsub.s32 5, %v1290
        %v1292 = vrot.slane %v224, %v1291
        %v1293 = vmul.f32 %v1292, %v1283
        %v1294 = vmul.f32 %v1292, %v1286
        %v1295 = vadd.f32 %v843, %v1293
        %v1296 = vadd.f32 %v844, %v1294
        %1297 = vst [vmem:[%s217] sm:$0xff] %v1295
        %1298 = vst [vmem:[%s217 + $0x8] sm:$0xff] %v1296
        %s1299 = sand.u32 %s97, 1
        %s1300 = scalar_lea.sflag [#allocation4], %s1299
        %s1301 = sand.u32 %s97, 1
        %s1302 = smul.addr %s1301, 16
        %s1303 = scalar_lea.vmem [#allocation8], %s1302
        // Predicated region
        $region45: #{tpu_custom_call.1} parent=31 // pred_check
          %p1304 = pneg %p107
        $region46: #{tpu_custom_call.1} parent=31 // pred_check_branch
          %1306 = sbr.rel (%p1304) target = $region48
        $region47: #{tpu_custom_call.1} parent=31 // pred_region
          %s1307 = smul.u32 2, %s21
          %s1309 = ssub.s32 256, 256
          %1310 = vsyncadd %s1300, %s1309
          %s1311 = smul.addr %s1307, 128
          %s1312 = scalar_lea.hbm %s3, %s1311
          %s1313 = sshll.u32 %s1303, 4
          %s1314 = int_to_ptr.vmem [resolvable:$true] %s1313
          %1319 = dma.vmem_to_hbm [thread:$0]  %s1314, 256, %s1312, %s1300, 128, 128, 8
        $region48: #{tpu_custom_call.1} parent=31 // pred_fallthru
          _
      $region32: #{tpu_custom_call.1} parent=5 // pred_fallthru
        _
      %p1320 = scmp.le.s32.totalorder 2, %s16
      // Predicated region
      $region49: #{tpu_custom_call.1} parent=5 // pred_check
        %p1321 = pneg %p1320
      $region50: #{tpu_custom_call.1} parent=5 // pred_check_branch
        %1323 = sbr.rel (%p1321) target = $region52
      $region51: #{tpu_custom_call.1} parent=5 // pred_region
        %s1324 = ssub.s32 %s16, 2
        // Predicated region
        $region53: #{tpu_custom_call.1} parent=51 // pred_check
          %p1325 = pneg %p113
        $region54: #{tpu_custom_call.1} parent=51 // pred_check_branch
          %1327 = sbr.rel (%p1325) target = $region56
        $region55: #{tpu_custom_call.1} parent=51 // pred_region
          %s1328 = sand.u32 %s98, 1
          %s1329 = scalar_lea.sflag [#allocation4], %s1328
          %s1330 = sand.u32 %s98, 1
          %s1331 = smul.addr %s1330, 16
          %s1332 = scalar_lea.vmem [#allocation8], %s1331
          %1333 = dma.done %s1329, 256
        $region56: #{tpu_custom_call.1} parent=51 // pred_fallthru
          _
      $region52: #{tpu_custom_call.1} parent=5 // pred_fallthru
        _
    $region6: #{tpu_custom_call.1} parent=1 // loop_footer
      %s20 = sadd.s32 1, %s16
    $region7: #{tpu_custom_call.1} parent=1 // loop_footer_branch
      %15 = sbr.rel target = $region3
    $region8: #{tpu_custom_call.1} parent=1 // loop_exit
      _
    %1334 = vsyncpa [#allocation3], 1
    %s1335 = scalar_lea.sflag [#allocation3], 1
    %1336 = vsyncpa %s1335, 1
    %1337 = vsyncpa [#allocation6], 1
    %1338 = vsyncpa [#allocation4], 1
    %s1339 = scalar_lea.sflag [#allocation4], 1
    %1340 = vsyncpa %s1339, 1

</llo_original>
